<compile_context>
chip_gen: v7x
topology: tpu7x:2x2x1
jax: 0.10.0
libtpu: 0.0.40
codegen_flags: <defaults>
</compile_context>

<pallas_src>
import jax
import jax.numpy as jnp
from jax.experimental import pallas as pl
from jax.experimental.pallas import tpu as pltpu


# ------------------------------ config / helpers -----------------------------

_LN_EPS = 1e-5                               # PyTorch nn.LayerNorm default
_TILE_CANDIDATES = (2048, 1024, 512, 256)    # row tiles (multiples of 8); capped for v5e/v7x VMEM
_CPARAMS = pltpu.CompilerParams(dimension_semantics=("parallel",))

_STORE_DT = jnp.bfloat16                     # HBM row-stream storage dtype
_PARAM_DT = jnp.float32                      # weights/bias/gamma/beta (tiny, resident)


def _silu(x):
    return x * jax.nn.sigmoid(x)


def _layer_norm(y, gamma, beta):
    # f32 statistics (y is always f32 inside the kernels).
    mu = jnp.mean(y, axis=-1, keepdims=True)
    var = jnp.mean(jnp.square(y - mu), axis=-1, keepdims=True)
    return (y - mu) * jax.lax.rsqrt(var + _LN_EPS) * gamma + beta


def _row_tiling(n):
    """Pick a row tile (multiple of 8) and padded row count.

    Prefers >=2 grid blocks (so a "parallel" 1-D grid spans both v7x
    TensorCores) with <=12.5% padding waste; otherwise a single full block.
    """
    n8 = pl.cdiv(n, 8) * 8
    for tm in _TILE_CANDIDATES:
        if n8 >= 2 * tm:                     # at least two grid blocks
            npad = pl.cdiv(n8, tm) * tm
            if (npad - n8) * 8 <= npad:      # <=12.5% waste
                return tm, npad
    return n8, n8                            # small problem: one block, zero waste


def _pad_rows(x, npad):
    n = x.shape[0]
    if npad == n:
        return x
    return jnp.pad(x, ((0, npad - n), (0, 0)))


def _pad_idx(idx, npad, fill):
    n = idx.shape[0]
    if npad == n:
        return idx
    return jnp.pad(idx, (0, npad - n), constant_values=fill)


def _row_spec(tm, f):
    return pl.BlockSpec((tm, f), lambda i: (i, 0))


def _full_spec(shape):
    # Constant block index: fetched once, stays resident across the grid.
    return pl.BlockSpec(shape, lambda i: (0, 0))


# ------------------------------ kernels --------------------------------------

def _ffb_ln_kernel(x_ref, w1_ref, b1_ref, w2_ref, b2_ref, g_ref, be_ref, o_ref):
    # FeedForwardBlock: Linear -> SiLU -> Linear -> LayerNorm (f32 compute).
    x = x_ref[...].astype(jnp.float32)
    h = _silu(jnp.dot(x, w1_ref[...], preferred_element_type=jnp.float32) + b1_ref[...])
    y = jnp.dot(h, w2_ref[...], preferred_element_type=jnp.float32) + b2_ref[...]
    o_ref[...] = _layer_norm(y, g_ref[...], be_ref[...]).astype(o_ref.dtype)


def _ffb_kernel(x_ref, w1_ref, b1_ref, w2_ref, b2_ref, o_ref):
    # FeedForwardBlock without LayerNorm.
    x = x_ref[...].astype(jnp.float32)
    h = _silu(jnp.dot(x, w1_ref[...], preferred_element_type=jnp.float32) + b1_ref[...])
    y = jnp.dot(h, w2_ref[...], preferred_element_type=jnp.float32) + b2_ref[...]
    o_ref[...] = y.astype(o_ref.dtype)


def _edge_update_kernel(e_ref, sr_ref,
                        w1e_ref, w1sr_ref, b1_ref,
                        w2_ref, b2_ref, g_ref, be_ref,
                        msg_ref, e_next_ref):
    # concat([e, n_s, n_r]) @ W1 computed as two split matmuls (K=H and K=2H);
    # the [n_s | n_r] slab arrives pre-concatenated (one dense 64-lane stream).
    e = e_ref[...].astype(jnp.float32)
    sr = sr_ref[...].astype(jnp.float32)
    h = (jnp.dot(e, w1e_ref[...], preferred_element_type=jnp.float32)
         + jnp.dot(sr, w1sr_ref[...], preferred_element_type=jnp.float32)
         + b1_ref[...])
    h = _silu(h)
    y = jnp.dot(h, w2_ref[...], preferred_element_type=jnp.float32) + b2_ref[...]
    y = _layer_norm(y, g_ref[...], be_ref[...])
    msg_ref[...] = y.astype(msg_ref.dtype)               # pre-residual message (aggregated outside)
    e_next_ref[...] = (e + y).astype(e_next_ref.dtype)   # fused residual: e += new_e


def _node_update_kernel(n_ref, a_ref, inv_ref,
                        w1n_ref, w1a_ref, b1_ref,
                        w2_ref, b2_ref, g_ref, be_ref,
                        n_next_ref):
    # concat([n, mean_agg]) @ W1 as two split matmuls; mean normalization
    # (inv in-degree) and the residual are fused here.
    n = n_ref[...].astype(jnp.float32)
    a = a_ref[...] * inv_ref[...]                        # f32 sum-agg -> mean-agg
    h = (jnp.dot(n, w1n_ref[...], preferred_element_type=jnp.float32)
         + jnp.dot(a, w1a_ref[...], preferred_element_type=jnp.float32)
         + b1_ref[...])
    h = _silu(h)
    y = jnp.dot(h, w2_ref[...], preferred_element_type=jnp.float32) + b2_ref[...]
    y = _layer_norm(y, g_ref[...], be_ref[...])
    n_next_ref[...] = (n + y).astype(n_next_ref.dtype)   # fused residual: n += new_n


# ----------------------------- pallas wrappers -------------------------------

def ffb_forward(x, p, use_layer_norm, tm, out_dtype):
    """FeedForwardBlock on a row-padded slab (rows of x are a multiple of tm)."""
    npad, din = x.shape
    dh = p["W1"].shape[1]
    dout = p["W2"].shape[1]

    in_specs = [_row_spec(tm, din),
                _full_spec((din, dh)), _full_spec((1, dh)),
                _full_spec((dh, dout)), _full_spec((1, dout))]
    args = [x, p["W1"], p["b1"], p["W2"], p["b2"]]
    if use_layer_norm:
        in_specs += [_full_spec((1, dout)), _full_spec((1, dout))]
        args += [p["gamma"], p["beta"]]
        kernel = _ffb_ln_kernel
    else:
        kernel = _ffb_kernel

    return pl.pallas_call(
        kernel,
        out_shape=jax.ShapeDtypeStruct((npad, dout), out_dtype),
        grid=(npad // tm,),
        in_specs=in_specs,
        out_specs=_row_spec(tm, dout),
        compiler_params=_CPARAMS,
    )(*args)


def edge_update(e, sr, p, tm):
    npad, H = e.shape
    row = _row_spec(tm, H)
    row2 = _row_spec(tm, 2 * H)
    hh = _full_spec((H, H))
    hh2 = _full_spec((2 * H, H))
    vec = _full_spec((1, H))
    msg, e_next = pl.pallas_call(
        _edge_update_kernel,
        out_shape=[jax.ShapeDtypeStruct((npad, H), e.dtype),
                   jax.ShapeDtypeStruct((npad, H), e.dtype)],
        grid=(npad // tm,),
        in_specs=[row, row2, hh, hh2, vec, hh, vec, vec, vec],
        out_specs=[row, row],
        input_output_aliases={0: 1},      # e buffer is reused in place for e_next
        compiler_params=_CPARAMS,
    )(e, sr,
      p["W1e"], p["W1sr"], p["b1"],
      p["W2"], p["b2"], p["gamma"], p["beta"])
    return msg, e_next


def node_update(n, agg, inv_deg, p, tm):
    npad, H = n.shape
    row = _row_spec(tm, H)
    col = _row_spec(tm, 1)
    hh = _full_spec((H, H))
    vec = _full_spec((1, H))
    return pl.pallas_call(
        _node_update_kernel,
        out_shape=jax.ShapeDtypeStruct((npad, H), n.dtype),
        grid=(npad // tm,),
        in_specs=[row, row, col, hh, hh, vec, hh, vec, vec, vec],
        out_specs=row,
        input_output_aliases={0: 0},      # n buffer is reused in place for n_next
        compiler_params=_CPARAMS,
    )(n, agg, inv_deg,
      p["W1n"], p["W1a"], p["b1"],
      p["W2"], p["b2"], p["gamma"], p["beta"])


# --------------------------- parameter construction --------------------------

def _init_ffb(key, din, dh, dout, use_layer_norm):
    k1, k2 = jax.random.split(key)
    p = {
        "W1": jax.random.normal(k1, (din, dh), _PARAM_DT) / jnp.sqrt(din),
        "b1": jnp.zeros((1, dh), _PARAM_DT),
        "W2": jax.random.normal(k2, (dh, dout), _PARAM_DT) / jnp.sqrt(dh),
        "b2": jnp.zeros((1, dout), _PARAM_DT),
    }
    if use_layer_norm:
        p["gamma"] = jnp.ones((1, dout), _PARAM_DT)
        p["beta"] = jnp.zeros((1, dout), _PARAM_DT)
    return p


def _init_edge_fn(key, H):
    k1, k2, k3 = jax.random.split(key, 3)
    s = 1.0 / jnp.sqrt(3.0 * H)   # fan-in of the conceptual [e|n_s|n_r] layer = 3H
    return {
        "W1e": jax.random.normal(k1, (H, H), _PARAM_DT) * s,
        # Stacked [W1_sender ; W1_receiver] matching the [n_s | n_r] gather slab.
        "W1sr": jax.random.normal(k2, (2 * H, H), _PARAM_DT) * s,
        "b1": jnp.zeros((1, H), _PARAM_DT),
        "W2": jax.random.normal(k3, (H, H), _PARAM_DT) / jnp.sqrt(H),
        "b2": jnp.zeros((1, H), _PARAM_DT),
        "gamma": jnp.ones((1, H), _PARAM_DT),
        "beta": jnp.zeros((1, H), _PARAM_DT),
    }


def _init_node_fn(key, H):
    k1, k2, k3 = jax.random.split(key, 3)
    s = 1.0 / jnp.sqrt(2.0 * H)   # fan-in of the conceptual [n|agg] layer = 2H
    return {
        "W1n": jax.random.normal(k1, (H, H), _PARAM_DT) * s,
        "W1a": jax.random.normal(k2, (H, H), _PARAM_DT) * s,
        "b1": jnp.zeros((1, H), _PARAM_DT),
        "W2": jax.random.normal(k3, (H, H), _PARAM_DT) / jnp.sqrt(H),
        "b2": jnp.zeros((1, H), _PARAM_DT),
        "gamma": jnp.ones((1, H), _PARAM_DT),
        "beta": jnp.zeros((1, H), _PARAM_DT),
    }


def init_processor_params(key, input_dim_edge, hidden_dim, message_passing_steps=4):
    H = hidden_dim
    keys = jax.random.split(key, 2 + 2 * message_passing_steps)
    params = {
        "embed_edge": _init_ffb(keys[0], input_dim_edge, H, H, True),
        "node_out": _init_ffb(keys[1], H, H, H, False),
        "steps": [],
    }
    for i in range(message_passing_steps):
        params["steps"].append({
            "edge_fn": _init_edge_fn(keys[2 + 2 * i], H),
            "node_fn": _init_node_fn(keys[3 + 2 * i], H),
        })
    return params


# ------------------------------ Processor forward ----------------------------

@jax.jit
def processor_forward(params, edge_idx, edge_features, node_features):
    E = edge_features.shape[0]
    N, H = node_features.shape

    tme, Epad = _row_tiling(E)
    tmn, Npad = _row_tiling(N)

    edge_idx = edge_idx.astype(jnp.int32)
    senders, receivers = edge_idx[0], edge_idx[1]

    # --- Sort edges by receiver once (topology fixed across the 4 steps). ----
    perm = jnp.argsort(receivers)
    inv_perm = jnp.argsort(perm)
    senders_s = senders[perm]
    recv_s = receivers[perm]
    ef_s = edge_features[perm]

    senders_pad = _pad_idx(senders_s, Epad, 0)        # padded edges gather row 0 (discarded)
    recv_gather_pad = _pad_idx(recv_s, Epad, 0)
    recv_scatter = _pad_idx(recv_s, Epad, Npad)       # id==Npad -> dropped by scatter (JAX default)
    gather_idx = jnp.stack([senders_pad, recv_gather_pad], axis=1)   # (Epad, 2)

    # Mean-aggregation denominators (fixed across steps); zero-degree nodes -> 0.
    counts = jax.ops.segment_sum(jnp.ones((Epad, 1), jnp.float32),
                                 recv_scatter, num_segments=Npad,
                                 indices_are_sorted=True)
    inv_deg = 1.0 / jnp.maximum(counts, 1.0)

    # Edge embedding FFB(+LN) on the once-padded, once-sorted edge slab (bf16 out).
    e = ffb_forward(_pad_rows(ef_s, Epad), params["embed_edge"],
                    use_layer_norm=True, tm=tme, out_dtype=_STORE_DT)
    n = _pad_rows(node_features, Npad).astype(_STORE_DT)

    for sp in params["steps"]:
        # Single XLA gather producing one [Epad, 2H] bf16 endpoint slab
        # ([sender | receiver] per row); the 3H concat itself never materializes
        # (split-W1 matmuls inside the kernel).
        sr = n[gather_idx].reshape(Epad, 2 * H)
        msg, e = edge_update(e, sr, sp["edge_fn"], tme)
        # Sorted segment-sum of the pre-residual message, f32 accumulation.
        # (mean normalization is folded into node_update via inv_deg)
        agg = jax.ops.segment_sum(msg.astype(jnp.float32), recv_scatter,
                                  num_segments=Npad, indices_are_sorted=True)
        n = node_update(n, agg, inv_deg, sp["node_fn"], tmn)

    # Un-sort / un-pad edge output; final node FFB (no LN) in f32.
    e_out = e[:E][inv_perm].astype(jnp.float32)
    n_out = ffb_forward(n, params["node_out"], use_layer_norm=False,
                        tm=tmn, out_dtype=jnp.float32)[:N]
    return e_out, n_out


# ----------------------------------- main -------------------------------------

if __name__ == "__main__":
    key = jax.random.PRNGKey(0)
    k_param, k_edge, k_node, k_idx = jax.random.split(key, 4)

    # Small shapes
    hidden_dim = 32
    input_dim_edge = 4
    num_nodes = 16
    num_edges = 40

    params = init_processor_params(k_param, input_dim_edge, hidden_dim)

    edge_features = jax.random.normal(k_edge, (num_edges, input_dim_edge), jnp.float32)
    node_features = jax.random.normal(k_node, (num_nodes, hidden_dim), jnp.float32)
    edge_idx = jax.random.randint(k_idx, (2, num_edges), 0, num_nodes, dtype=jnp.int32)

    e_out, n_out = processor_forward(params, edge_idx, edge_features, node_features)
    jax.block_until_ready((e_out, n_out))

    assert e_out.shape == (num_edges, hidden_dim)
    assert n_out.shape == (num_nodes, hidden_dim)
    assert bool(jnp.all(jnp.isfinite(e_out))) and bool(jnp.all(jnp.isfinite(n_out)))

    print("KERNEL_OK")
</pallas_src>

<mosaic_0001>
module attributes {stable_mosaic.version = 11 : i64} {
  func.func @_ffb_ln_kernel(%arg0: i32, %arg1: memref<40x4xf32, #tpu.memory_space<vmem>>, %arg2: memref<4x32xf32, #tpu.memory_space<vmem>>, %arg3: memref<1x32xf32, #tpu.memory_space<vmem>>, %arg4: memref<32x32xf32, #tpu.memory_space<vmem>>, %arg5: memref<1x32xf32, #tpu.memory_space<vmem>>, %arg6: memref<1x32xf32, #tpu.memory_space<vmem>>, %arg7: memref<1x32xf32, #tpu.memory_space<vmem>>, %arg8: memref<40x32xbf16, #tpu.memory_space<vmem>>) attributes {dimension_semantics = [#tpu.dimension_semantics<parallel>], iteration_bounds = array<i64: 1>, scalar_prefetch = 0 : i64, scratch_operands = 0 : i64, tpu.core_type = #tpu.core_type<tc>, window_params = [{transform_indices = @transform_0, window_bounds = array<i64: 40, 4>}, {pipeline_mode = #tpu.pipeline_mode<synchronous>, transform_indices = @transform_1, window_bounds = array<i64: 4, 32>}, {pipeline_mode = #tpu.pipeline_mode<synchronous>, transform_indices = @transform_2, window_bounds = array<i64: 1, 32>}, {pipeline_mode = #tpu.pipeline_mode<synchronous>, transform_indices = @transform_3, window_bounds = array<i64: 32, 32>}, {pipeline_mode = #tpu.pipeline_mode<synchronous>, transform_indices = @transform_4, window_bounds = array<i64: 1, 32>}, {pipeline_mode = #tpu.pipeline_mode<synchronous>, transform_indices = @transform_5, window_bounds = array<i64: 1, 32>}, {pipeline_mode = #tpu.pipeline_mode<synchronous>, transform_indices = @transform_6, window_bounds = array<i64: 1, 32>}, {transform_indices = @transform_7, window_bounds = array<i64: 40, 32>}]} {
    %c0 = arith.constant 0 : index
    %c0_0 = arith.constant 0 : index
    %0 = vector.load %arg1[%c0, %c0_0] : memref<40x4xf32, #tpu.memory_space<vmem>>, vector<40x4xf32>
    %c0_1 = arith.constant 0 : index
    %c0_2 = arith.constant 0 : index
    %1 = vector.load %arg2[%c0_1, %c0_2] : memref<4x32xf32, #tpu.memory_space<vmem>>, vector<4x32xf32>
    %cst = arith.constant dense<0.000000e+00> : vector<40x32xf32>
    %2 = tpu.matmul %0, %1, %cst {dimension_numbers = #tpu.dot_dimension_numbers<[1], [0], [0], [1], [0, 0, 1, 1], [], []>} : vector<40x4xf32>, vector<4x32xf32>, vector<40x32xf32> -> vector<40x32xf32>
    %c0_3 = arith.constant 0 : index
    %c0_4 = arith.constant 0 : index
    %3 = vector.load %arg3[%c0_3, %c0_4] : memref<1x32xf32, #tpu.memory_space<vmem>>, vector<1x32xf32>
    %4 = vector.broadcast %3 : vector<1x32xf32> to vector<40x32xf32>
    %5 = arith.addf %2, %4 : vector<40x32xf32>
    %6 = arith.negf %5 : vector<40x32xf32>
    %7 = math.exp %6 : vector<40x32xf32>
    %cst_5 = arith.constant 1.000000e+00 : f32
    %8 = vector.broadcast %cst_5 : f32 to vector<40x32xf32>
    %9 = arith.addf %8, %7 : vector<40x32xf32>
    %10 = arith.divf %8, %9 : vector<40x32xf32>
    %11 = arith.mulf %5, %10 : vector<40x32xf32>
    %c0_6 = arith.constant 0 : index
    %c0_7 = arith.constant 0 : index
    %12 = vector.load %arg4[%c0_6, %c0_7] : memref<32x32xf32, #tpu.memory_space<vmem>>, vector<32x32xf32>
    %cst_8 = arith.constant dense<0.000000e+00> : vector<40x32xf32>
    %13 = tpu.matmul %11, %12, %cst_8 {dimension_numbers = #tpu.dot_dimension_numbers<[1], [0], [0], [1], [0, 0, 1, 1], [], []>} : vector<40x32xf32>, vector<32x32xf32>, vector<40x32xf32> -> vector<40x32xf32>
    %c0_9 = arith.constant 0 : index
    %c0_10 = arith.constant 0 : index
    %14 = vector.load %arg5[%c0_9, %c0_10] : memref<1x32xf32, #tpu.memory_space<vmem>>, vector<1x32xf32>
    %15 = vector.broadcast %14 : vector<1x32xf32> to vector<40x32xf32>
    %16 = arith.addf %13, %15 : vector<40x32xf32>
    %c0_11 = arith.constant 0 : index
    %c0_12 = arith.constant 0 : index
    %17 = vector.load %arg6[%c0_11, %c0_12] : memref<1x32xf32, #tpu.memory_space<vmem>>, vector<1x32xf32>
    %c0_13 = arith.constant 0 : index
    %c0_14 = arith.constant 0 : index
    %18 = vector.load %arg7[%c0_13, %c0_14] : memref<1x32xf32, #tpu.memory_space<vmem>>, vector<1x32xf32>
    %cst_15 = arith.constant dense<0.000000e+00> : vector<40xf32>
    %19 = vector.multi_reduction <add>, %16, %cst_15 [1] : vector<40x32xf32> to vector<40xf32>
    %20 = vector.shape_cast %19 : vector<40xf32> to vector<40x1xf32>
    %cst_16 = arith.constant 3.200000e+01 : f32
    %21 = vector.broadcast %cst_16 : f32 to vector<40x1xf32>
    %22 = arith.divf %20, %21 : vector<40x1xf32>
    %23 = vector.broadcast %22 : vector<40x1xf32> to vector<40x32xf32>
    %24 = arith.subf %16, %23 : vector<40x32xf32>
    %25 = arith.mulf %24, %24 : vector<40x32xf32>
    %cst_17 = arith.constant dense<0.000000e+00> : vector<40xf32>
    %26 = vector.multi_reduction <add>, %25, %cst_17 [1] : vector<40x32xf32> to vector<40xf32>
    %27 = vector.shape_cast %26 : vector<40xf32> to vector<40x1xf32>
    %cst_18 = arith.constant 3.200000e+01 : f32
    %28 = vector.broadcast %cst_18 : f32 to vector<40x1xf32>
    %29 = arith.divf %27, %28 : vector<40x1xf32>
    %30 = vector.broadcast %22 : vector<40x1xf32> to vector<40x32xf32>
    %31 = arith.subf %16, %30 : vector<40x32xf32>
    %cst_19 = arith.constant 9.99999974E-6 : f32
    %32 = vector.broadcast %cst_19 : f32 to vector<40x1xf32>
    %33 = arith.addf %29, %32 : vector<40x1xf32>
    %34 = math.rsqrt %33 : vector<40x1xf32>
    %35 = vector.broadcast %34 : vector<40x1xf32> to vector<40x32xf32>
    %36 = arith.mulf %31, %35 : vector<40x32xf32>
    %37 = vector.broadcast %17 : vector<1x32xf32> to vector<40x32xf32>
    %38 = arith.mulf %36, %37 : vector<40x32xf32>
    %39 = vector.broadcast %18 : vector<1x32xf32> to vector<40x32xf32>
    %40 = arith.addf %38, %39 : vector<40x32xf32>
    %41 = arith.truncf %40 : vector<40x32xf32> to vector<40x32xbf16>
    %c0_20 = arith.constant 0 : index
    %c0_21 = arith.constant 0 : index
    %42 = vector.load %arg8[%c0_20, %c0_21] : memref<40x32xbf16, #tpu.memory_space<vmem>>, vector<40x32xbf16>
    tpu.vector_store %arg8[%c0_20, %c0_21], %41 {strides = array<i32>} : memref<40x32xbf16, #tpu.memory_space<vmem>>, vector<40x32xbf16>,
    return
  }
  func.func @transform_0(%arg0: i32) -> (i32, i32) {
    %c0_i32 = arith.constant 0 : i32
    %c0_i32_0 = arith.constant 0 : i32
    return %arg0, %c0_i32 : i32, i32
  }
  func.func @transform_1(%arg0: i32) -> (i32, i32) {
    %c0_i32 = arith.constant 0 : i32
    %c0_i32_0 = arith.constant 0 : i32
    %c0_i32_1 = arith.constant 0 : i32
    return %c0_i32, %c0_i32_0 : i32, i32
  }
  func.func @transform_2(%arg0: i32) -> (i32, i32) {
    %c0_i32 = arith.constant 0 : i32
    %c0_i32_0 = arith.constant 0 : i32
    %c0_i32_1 = arith.constant 0 : i32
    return %c0_i32, %c0_i32_0 : i32, i32
  }
  func.func @transform_3(%arg0: i32) -> (i32, i32) {
    %c0_i32 = arith.constant 0 : i32
    %c0_i32_0 = arith.constant 0 : i32
    %c0_i32_1 = arith.constant 0 : i32
    return %c0_i32, %c0_i32_0 : i32, i32
  }
  func.func @transform_4(%arg0: i32) -> (i32, i32) {
    %c0_i32 = arith.constant 0 : i32
    %c0_i32_0 = arith.constant 0 : i32
    %c0_i32_1 = arith.constant 0 : i32
    return %c0_i32, %c0_i32_0 : i32, i32
  }
  func.func @transform_5(%arg0: i32) -> (i32, i32) {
    %c0_i32 = arith.constant 0 : i32
    %c0_i32_0 = arith.constant 0 : i32
    %c0_i32_1 = arith.constant 0 : i32
    return %c0_i32, %c0_i32_0 : i32, i32
  }
  func.func @transform_6(%arg0: i32) -> (i32, i32) {
    %c0_i32 = arith.constant 0 : i32
    %c0_i32_0 = arith.constant 0 : i32
    %c0_i32_1 = arith.constant 0 : i32
    return %c0_i32, %c0_i32_0 : i32, i32
  }
  func.func @transform_7(%arg0: i32) -> (i32, i32) {
    %c0_i32 = arith.constant 0 : i32
    %c0_i32_0 = arith.constant 0 : i32
    return %arg0, %c0_i32 : i32, i32
  }
}

module attributes {stable_mosaic.version = 11 : i64} {
  func.func @_edge_update_kernel(%arg0: i32, %arg1: memref<40x32xbf16, #tpu.memory_space<vmem>>, %arg2: memref<40x64xbf16, #tpu.memory_space<vmem>>, %arg3: memref<32x32xf32, #tpu.memory_space<vmem>>, %arg4: memref<64x32xf32, #tpu.memory_space<vmem>>, %arg5: memref<1x32xf32, #tpu.memory_space<vmem>>, %arg6: memref<32x32xf32, #tpu.memory_space<vmem>>, %arg7: memref<1x32xf32, #tpu.memory_space<vmem>>, %arg8: memref<1x32xf32, #tpu.memory_space<vmem>>, %arg9: memref<1x32xf32, #tpu.memory_space<vmem>>, %arg10: memref<40x32xbf16, #tpu.memory_space<vmem>>, %arg11: memref<40x32xbf16, #tpu.memory_space<vmem>>) attributes {dimension_semantics = [#tpu.dimension_semantics<parallel>], iteration_bounds = array<i64: 1>, scalar_prefetch = 0 : i64, scratch_operands = 0 : i64, tpu.core_type = #tpu.core_type<tc>, window_params = [{transform_indices = @transform_0, window_bounds = array<i64: 40, 32>}, {transform_indices = @transform_1, window_bounds = array<i64: 40, 64>}, {pipeline_mode = #tpu.pipeline_mode<synchronous>, transform_indices = @transform_2, window_bounds = array<i64: 32, 32>}, {pipeline_mode = #tpu.pipeline_mode<synchronous>, transform_indices = @transform_3, window_bounds = array<i64: 64, 32>}, {pipeline_mode = #tpu.pipeline_mode<synchronous>, transform_indices = @transform_4, window_bounds = array<i64: 1, 32>}, {pipeline_mode = #tpu.pipeline_mode<synchronous>, transform_indices = @transform_5, window_bounds = array<i64: 32, 32>}, {pipeline_mode = #tpu.pipeline_mode<synchronous>, transform_indices = @transform_6, window_bounds = array<i64: 1, 32>}, {pipeline_mode = #tpu.pipeline_mode<synchronous>, transform_indices = @transform_7, window_bounds = array<i64: 1, 32>}, {pipeline_mode = #tpu.pipeline_mode<synchronous>, transform_indices = @transform_8, window_bounds = array<i64: 1, 32>}, {transform_indices = @transform_9, window_bounds = array<i64: 40, 32>}, {transform_indices = @transform_10, window_bounds = array<i64: 40, 32>}]} {
    %c0 = arith.constant 0 : index
    %c0_0 = arith.constant 0 : index
    %0 = vector.load %arg1[%c0, %c0_0] : memref<40x32xbf16, #tpu.memory_space<vmem>>, vector<40x32xbf16>
    %1 = arith.extf %0 : vector<40x32xbf16> to vector<40x32xf32>
    %c0_1 = arith.constant 0 : index
    %c0_2 = arith.constant 0 : index
    %2 = vector.load %arg2[%c0_1, %c0_2] : memref<40x64xbf16, #tpu.memory_space<vmem>>, vector<40x64xbf16>
    %3 = arith.extf %2 : vector<40x64xbf16> to vector<40x64xf32>
    %c0_3 = arith.constant 0 : index
    %c0_4 = arith.constant 0 : index
    %4 = vector.load %arg3[%c0_3, %c0_4] : memref<32x32xf32, #tpu.memory_space<vmem>>, vector<32x32xf32>
    %cst = arith.constant dense<0.000000e+00> : vector<40x32xf32>
    %5 = tpu.matmul %1, %4, %cst {dimension_numbers = #tpu.dot_dimension_numbers<[1], [0], [0], [1], [0, 0, 1, 1], [], []>} : vector<40x32xf32>, vector<32x32xf32>, vector<40x32xf32> -> vector<40x32xf32>
    %c0_5 = arith.constant 0 : index
    %c0_6 = arith.constant 0 : index
    %6 = vector.load %arg4[%c0_5, %c0_6] : memref<64x32xf32, #tpu.memory_space<vmem>>, vector<64x32xf32>
    %cst_7 = arith.constant dense<0.000000e+00> : vector<40x32xf32>
    %7 = tpu.matmul %3, %6, %cst_7 {dimension_numbers = #tpu.dot_dimension_numbers<[1], [0], [0], [1], [0, 0, 1, 1], [], []>} : vector<40x64xf32>, vector<64x32xf32>, vector<40x32xf32> -> vector<40x32xf32>
    %8 = arith.addf %5, %7 : vector<40x32xf32>
    %c0_8 = arith.constant 0 : index
    %c0_9 = arith.constant 0 : index
    %9 = vector.load %arg5[%c0_8, %c0_9] : memref<1x32xf32, #tpu.memory_space<vmem>>, vector<1x32xf32>
    %10 = vector.broadcast %9 : vector<1x32xf32> to vector<40x32xf32>
    %11 = arith.addf %8, %10 : vector<40x32xf32>
    %12 = arith.negf %11 : vector<40x32xf32>
    %13 = math.exp %12 : vector<40x32xf32>
    %cst_10 = arith.constant 1.000000e+00 : f32
    %14 = vector.broadcast %cst_10 : f32 to vector<40x32xf32>
    %15 = arith.addf %14, %13 : vector<40x32xf32>
    %16 = arith.divf %14, %15 : vector<40x32xf32>
    %17 = arith.mulf %11, %16 : vector<40x32xf32>
    %c0_11 = arith.constant 0 : index
    %c0_12 = arith.constant 0 : index
    %18 = vector.load %arg6[%c0_11, %c0_12] : memref<32x32xf32, #tpu.memory_space<vmem>>, vector<32x32xf32>
    %cst_13 = arith.constant dense<0.000000e+00> : vector<40x32xf32>
    %19 = tpu.matmul %17, %18, %cst_13 {dimension_numbers = #tpu.dot_dimension_numbers<[1], [0], [0], [1], [0, 0, 1, 1], [], []>} : vector<40x32xf32>, vector<32x32xf32>, vector<40x32xf32> -> vector<40x32xf32>
    %c0_14 = arith.constant 0 : index
    %c0_15 = arith.constant 0 : index
    %20 = vector.load %arg7[%c0_14, %c0_15] : memref<1x32xf32, #tpu.memory_space<vmem>>, vector<1x32xf32>
    %21 = vector.broadcast %20 : vector<1x32xf32> to vector<40x32xf32>
    %22 = arith.addf %19, %21 : vector<40x32xf32>
    %c0_16 = arith.constant 0 : index
    %c0_17 = arith.constant 0 : index
    %23 = vector.load %arg8[%c0_16, %c0_17] : memref<1x32xf32, #tpu.memory_space<vmem>>, vector<1x32xf32>
    %c0_18 = arith.constant 0 : index
    %c0_19 = arith.constant 0 : index
    %24 = vector.load %arg9[%c0_18, %c0_19] : memref<1x32xf32, #tpu.memory_space<vmem>>, vector<1x32xf32>
    %cst_20 = arith.constant dense<0.000000e+00> : vector<40xf32>
    %25 = vector.multi_reduction <add>, %22, %cst_20 [1] : vector<40x32xf32> to vector<40xf32>
    %26 = vector.shape_cast %25 : vector<40xf32> to vector<40x1xf32>
    %cst_21 = arith.constant 3.200000e+01 : f32
    %27 = vector.broadcast %cst_21 : f32 to vector<40x1xf32>
    %28 = arith.divf %26, %27 : vector<40x1xf32>
    %29 = vector.broadcast %28 : vector<40x1xf32> to vector<40x32xf32>
    %30 = arith.subf %22, %29 : vector<40x32xf32>
    %31 = arith.mulf %30, %30 : vector<40x32xf32>
    %cst_22 = arith.constant dense<0.000000e+00> : vector<40xf32>
    %32 = vector.multi_reduction <add>, %31, %cst_22 [1] : vector<40x32xf32> to vector<40xf32>
    %33 = vector.shape_cast %32 : vector<40xf32> to vector<40x1xf32>
    %cst_23 = arith.constant 3.200000e+01 : f32
    %34 = vector.broadcast %cst_23 : f32 to vector<40x1xf32>
    %35 = arith.divf %33, %34 : vector<40x1xf32>
    %36 = vector.broadcast %28 : vector<40x1xf32> to vector<40x32xf32>
    %37 = arith.subf %22, %36 : vector<40x32xf32>
    %cst_24 = arith.constant 9.99999974E-6 : f32
    %38 = vector.broadcast %cst_24 : f32 to vector<40x1xf32>
    %39 = arith.addf %35, %38 : vector<40x1xf32>
    %40 = math.rsqrt %39 : vector<40x1xf32>
    %41 = vector.broadcast %40 : vector<40x1xf32> to vector<40x32xf32>
    %42 = arith.mulf %37, %41 : vector<40x32xf32>
    %43 = vector.broadcast %23 : vector<1x32xf32> to vector<40x32xf32>
    %44 = arith.mulf %42, %43 : vector<40x32xf32>
    %45 = vector.broadcast %24 : vector<1x32xf32> to vector<40x32xf32>
    %46 = arith.addf %44, %45 : vector<40x32xf32>
    %47 = arith.truncf %46 : vector<40x32xf32> to vector<40x32xbf16>
    %c0_25 = arith.constant 0 : index
    %c0_26 = arith.constant 0 : index
    %48 = vector.load %arg10[%c0_25, %c0_26] : memref<40x32xbf16, #tpu.memory_space<vmem>>, vector<40x32xbf16>
    tpu.vector_store %arg10[%c0_25, %c0_26], %47 {strides = array<i32>} : memref<40x32xbf16, #tpu.memory_space<vmem>>, vector<40x32xbf16>,
    %49 = arith.addf %1, %46 : vector<40x32xf32>
    %50 = arith.truncf %49 : vector<40x32xf32> to vector<40x32xbf16>
    %c0_27 = arith.constant 0 : index
    %c0_28 = arith.constant 0 : index
    %51 = vector.load %arg11[%c0_27, %c0_28] : memref<40x32xbf16, #tpu.memory_space<vmem>>, vector<40x32xbf16>
    tpu.vector_store %arg11[%c0_27, %c0_28], %50 {strides = array<i32>} : memref<40x32xbf16, #tpu.memory_space<vmem>>, vector<40x32xbf16>,
    return
  }
  func.func @transform_0(%arg0: i32) -> (i32, i32) {
    %c0_i32 = arith.constant 0 : i32
    %c0_i32_0 = arith.constant 0 : i32
    return %arg0, %c0_i32 : i32, i32
  }
  func.func @transform_1(%arg0: i32) -> (i32, i32) {
    %c0_i32 = arith.constant 0 : i32
    %c0_i32_0 = arith.constant 0 : i32
    return %arg0, %c0_i32 : i32, i32
  }
  func.func @transform_2(%arg0: i32) -> (i32, i32) {
    %c0_i32 = arith.constant 0 : i32
    %c0_i32_0 = arith.constant 0 : i32
    %c0_i32_1 = arith.constant 0 : i32
    return %c0_i32, %c0_i32_0 : i32, i32
  }
  func.func @transform_3(%arg0: i32) -> (i32, i32) {
    %c0_i32 = arith.constant 0 : i32
    %c0_i32_0 = arith.constant 0 : i32
    %c0_i32_1 = arith.constant 0 : i32
    return %c0_i32, %c0_i32_0 : i32, i32
  }
  func.func @transform_4(%arg0: i32) -> (i32, i32) {
    %c0_i32 = arith.constant 0 : i32
    %c0_i32_0 = arith.constant 0 : i32
    %c0_i32_1 = arith.constant 0 : i32
    return %c0_i32, %c0_i32_0 : i32, i32
  }
  func.func @transform_5(%arg0: i32) -> (i32, i32) {
    %c0_i32 = arith.constant 0 : i32
    %c0_i32_0 = arith.constant 0 : i32
    %c0_i32_1 = arith.constant 0 : i32
    return %c0_i32, %c0_i32_0 : i32, i32
  }
  func.func @transform_6(%arg0: i32) -> (i32, i32) {
    %c0_i32 = arith.constant 0 : i32
    %c0_i32_0 = arith.constant 0 : i32
    %c0_i32_1 = arith.constant 0 : i32
    return %c0_i32, %c0_i32_0 : i32, i32
  }
  func.func @transform_7(%arg0: i32) -> (i32, i32) {
    %c0_i32 = arith.constant 0 : i32
    %c0_i32_0 = arith.constant 0 : i32
    %c0_i32_1 = arith.constant 0 : i32
    return %c0_i32, %c0_i32_0 : i32, i32
  }
  func.func @transform_8(%arg0: i32) -> (i32, i32) {
    %c0_i32 = arith.constant 0 : i32
    %c0_i32_0 = arith.constant 0 : i32
    %c0_i32_1 = arith.constant 0 : i32
    return %c0_i32, %c0_i32_0 : i32, i32
  }
  func.func @transform_9(%arg0: i32) -> (i32, i32) {
    %c0_i32 = arith.constant 0 : i32
    %c0_i32_0 = arith.constant 0 : i32
    return %arg0, %c0_i32 : i32, i32
  }
  func.func @transform_10(%arg0: i32) -> (i32, i32) {
    %c0_i32 = arith.constant 0 : i32
    %c0_i32_0 = arith.constant 0 : i32
    return %arg0, %c0_i32 : i32, i32
  }
}

module attributes {stable_mosaic.version = 11 : i64} {
  func.func @_node_update_kernel(%arg0: i32, %arg1: memref<16x32xbf16, #tpu.memory_space<vmem>>, %arg2: memref<16x32xf32, #tpu.memory_space<vmem>>, %arg3: memref<16x1xf32, #tpu.memory_space<vmem>>, %arg4: memref<32x32xf32, #tpu.memory_space<vmem>>, %arg5: memref<32x32xf32, #tpu.memory_space<vmem>>, %arg6: memref<1x32xf32, #tpu.memory_space<vmem>>, %arg7: memref<32x32xf32, #tpu.memory_space<vmem>>, %arg8: memref<1x32xf32, #tpu.memory_space<vmem>>, %arg9: memref<1x32xf32, #tpu.memory_space<vmem>>, %arg10: memref<1x32xf32, #tpu.memory_space<vmem>>, %arg11: memref<16x32xbf16, #tpu.memory_space<vmem>>) attributes {dimension_semantics = [#tpu.dimension_semantics<parallel>], iteration_bounds = array<i64: 1>, scalar_prefetch = 0 : i64, scratch_operands = 0 : i64, tpu.core_type = #tpu.core_type<tc>, window_params = [{transform_indices = @transform_0, window_bounds = array<i64: 16, 32>}, {transform_indices = @transform_1, window_bounds = array<i64: 16, 32>}, {transform_indices = @transform_2, window_bounds = array<i64: 16, 1>}, {pipeline_mode = #tpu.pipeline_mode<synchronous>, transform_indices = @transform_3, window_bounds = array<i64: 32, 32>}, {pipeline_mode = #tpu.pipeline_mode<synchronous>, transform_indices = @transform_4, window_bounds = array<i64: 32, 32>}, {pipeline_mode = #tpu.pipeline_mode<synchronous>, transform_indices = @transform_5, window_bounds = array<i64: 1, 32>}, {pipeline_mode = #tpu.pipeline_mode<synchronous>, transform_indices = @transform_6, window_bounds = array<i64: 32, 32>}, {pipeline_mode = #tpu.pipeline_mode<synchronous>, transform_indices = @transform_7, window_bounds = array<i64: 1, 32>}, {pipeline_mode = #tpu.pipeline_mode<synchronous>, transform_indices = @transform_8, window_bounds = array<i64: 1, 32>}, {pipeline_mode = #tpu.pipeline_mode<synchronous>, transform_indices = @transform_9, window_bounds = array<i64: 1, 32>}, {transform_indices = @transform_10, window_bounds = array<i64: 16, 32>}]} {
    %c0 = arith.constant 0 : index
    %c0_0 = arith.constant 0 : index
    %0 = vector.load %arg1[%c0, %c0_0] : memref<16x32xbf16, #tpu.memory_space<vmem>>, vector<16x32xbf16>
    %1 = arith.extf %0 : vector<16x32xbf16> to vector<16x32xf32>
    %c0_1 = arith.constant 0 : index
    %c0_2 = arith.constant 0 : index
    %2 = vector.load %arg2[%c0_1, %c0_2] : memref<16x32xf32, #tpu.memory_space<vmem>>, vector<16x32xf32>
    %c0_3 = arith.constant 0 : index
    %c0_4 = arith.constant 0 : index
    %3 = vector.load %arg3[%c0_3, %c0_4] : memref<16x1xf32, #tpu.memory_space<vmem>>, vector<16x1xf32>
    %4 = vector.broadcast %3 : vector<16x1xf32> to vector<16x32xf32>
    %5 = arith.mulf %2, %4 : vector<16x32xf32>
    %c0_5 = arith.constant 0 : index
    %c0_6 = arith.constant 0 : index
    %6 = vector.load %arg4[%c0_5, %c0_6] : memref<32x32xf32, #tpu.memory_space<vmem>>, vector<32x32xf32>
    %cst = arith.constant dense<0.000000e+00> : vector<16x32xf32>
    %7 = tpu.matmul %1, %6, %cst {dimension_numbers = #tpu.dot_dimension_numbers<[1], [0], [0], [1], [0, 0, 1, 1], [], []>} : vector<16x32xf32>, vector<32x32xf32>, vector<16x32xf32> -> vector<16x32xf32>
    %c0_7 = arith.constant 0 : index
    %c0_8 = arith.constant 0 : index
    %8 = vector.load %arg5[%c0_7, %c0_8] : memref<32x32xf32, #tpu.memory_space<vmem>>, vector<32x32xf32>
    %cst_9 = arith.constant dense<0.000000e+00> : vector<16x32xf32>
    %9 = tpu.matmul %5, %8, %cst_9 {dimension_numbers = #tpu.dot_dimension_numbers<[1], [0], [0], [1], [0, 0, 1, 1], [], []>} : vector<16x32xf32>, vector<32x32xf32>, vector<16x32xf32> -> vector<16x32xf32>
    %10 = arith.addf %7, %9 : vector<16x32xf32>
    %c0_10 = arith.constant 0 : index
    %c0_11 = arith.constant 0 : index
    %11 = vector.load %arg6[%c0_10, %c0_11] : memref<1x32xf32, #tpu.memory_space<vmem>>, vector<1x32xf32>
    %12 = vector.broadcast %11 : vector<1x32xf32> to vector<16x32xf32>
    %13 = arith.addf %10, %12 : vector<16x32xf32>
    %14 = arith.negf %13 : vector<16x32xf32>
    %15 = math.exp %14 : vector<16x32xf32>
    %cst_12 = arith.constant 1.000000e+00 : f32
    %16 = vector.broadcast %cst_12 : f32 to vector<16x32xf32>
    %17 = arith.addf %16, %15 : vector<16x32xf32>
    %18 = arith.divf %16, %17 : vector<16x32xf32>
    %19 = arith.mulf %13, %18 : vector<16x32xf32>
    %c0_13 = arith.constant 0 : index
    %c0_14 = arith.constant 0 : index
    %20 = vector.load %arg7[%c0_13, %c0_14] : memref<32x32xf32, #tpu.memory_space<vmem>>, vector<32x32xf32>
    %cst_15 = arith.constant dense<0.000000e+00> : vector<16x32xf32>
    %21 = tpu.matmul %19, %20, %cst_15 {dimension_numbers = #tpu.dot_dimension_numbers<[1], [0], [0], [1], [0, 0, 1, 1], [], []>} : vector<16x32xf32>, vector<32x32xf32>, vector<16x32xf32> -> vector<16x32xf32>
    %c0_16 = arith.constant 0 : index
    %c0_17 = arith.constant 0 : index
    %22 = vector.load %arg8[%c0_16, %c0_17] : memref<1x32xf32, #tpu.memory_space<vmem>>, vector<1x32xf32>
    %23 = vector.broadcast %22 : vector<1x32xf32> to vector<16x32xf32>
    %24 = arith.addf %21, %23 : vector<16x32xf32>
    %c0_18 = arith.constant 0 : index
    %c0_19 = arith.constant 0 : index
    %25 = vector.load %arg9[%c0_18, %c0_19] : memref<1x32xf32, #tpu.memory_space<vmem>>, vector<1x32xf32>
    %c0_20 = arith.constant 0 : index
    %c0_21 = arith.constant 0 : index
    %26 = vector.load %arg10[%c0_20, %c0_21] : memref<1x32xf32, #tpu.memory_space<vmem>>, vector<1x32xf32>
    %cst_22 = arith.constant dense<0.000000e+00> : vector<16xf32>
    %27 = vector.multi_reduction <add>, %24, %cst_22 [1] : vector<16x32xf32> to vector<16xf32>
    %28 = vector.shape_cast %27 : vector<16xf32> to vector<16x1xf32>
    %cst_23 = arith.constant 3.200000e+01 : f32
    %29 = vector.broadcast %cst_23 : f32 to vector<16x1xf32>
    %30 = arith.divf %28, %29 : vector<16x1xf32>
    %31 = vector.broadcast %30 : vector<16x1xf32> to vector<16x32xf32>
    %32 = arith.subf %24, %31 : vector<16x32xf32>
    %33 = arith.mulf %32, %32 : vector<16x32xf32>
    %cst_24 = arith.constant dense<0.000000e+00> : vector<16xf32>
    %34 = vector.multi_reduction <add>, %33, %cst_24 [1] : vector<16x32xf32> to vector<16xf32>
    %35 = vector.shape_cast %34 : vector<16xf32> to vector<16x1xf32>
    %cst_25 = arith.constant 3.200000e+01 : f32
    %36 = vector.broadcast %cst_25 : f32 to vector<16x1xf32>
    %37 = arith.divf %35, %36 : vector<16x1xf32>
    %38 = vector.broadcast %30 : vector<16x1xf32> to vector<16x32xf32>
    %39 = arith.subf %24, %38 : vector<16x32xf32>
    %cst_26 = arith.constant 9.99999974E-6 : f32
    %40 = vector.broadcast %cst_26 : f32 to vector<16x1xf32>
    %41 = arith.addf %37, %40 : vector<16x1xf32>
    %42 = math.rsqrt %41 : vector<16x1xf32>
    %43 = vector.broadcast %42 : vector<16x1xf32> to vector<16x32xf32>
    %44 = arith.mulf %39, %43 : vector<16x32xf32>
    %45 = vector.broadcast %25 : vector<1x32xf32> to vector<16x32xf32>
    %46 = arith.mulf %44, %45 : vector<16x32xf32>
    %47 = vector.broadcast %26 : vector<1x32xf32> to vector<16x32xf32>
    %48 = arith.addf %46, %47 : vector<16x32xf32>
    %49 = arith.addf %1, %48 : vector<16x32xf32>
    %50 = arith.truncf %49 : vector<16x32xf32> to vector<16x32xbf16>
    %c0_27 = arith.constant 0 : index
    %c0_28 = arith.constant 0 : index
    %51 = vector.load %arg11[%c0_27, %c0_28] : memref<16x32xbf16, #tpu.memory_space<vmem>>, vector<16x32xbf16>
    tpu.vector_store %arg11[%c0_27, %c0_28], %50 {strides = array<i32>} : memref<16x32xbf16, #tpu.memory_space<vmem>>, vector<16x32xbf16>,
    return
  }
  func.func @transform_0(%arg0: i32) -> (i32, i32) {
    %c0_i32 = arith.constant 0 : i32
    %c0_i32_0 = arith.constant 0 : i32
    return %arg0, %c0_i32 : i32, i32
  }
  func.func @transform_1(%arg0: i32) -> (i32, i32) {
    %c0_i32 = arith.constant 0 : i32
    %c0_i32_0 = arith.constant 0 : i32
    return %arg0, %c0_i32 : i32, i32
  }
  func.func @transform_2(%arg0: i32) -> (i32, i32) {
    %c0_i32 = arith.constant 0 : i32
    %c0_i32_0 = arith.constant 0 : i32
    return %arg0, %c0_i32 : i32, i32
  }
  func.func @transform_3(%arg0: i32) -> (i32, i32) {
    %c0_i32 = arith.constant 0 : i32
    %c0_i32_0 = arith.constant 0 : i32
    %c0_i32_1 = arith.constant 0 : i32
    return %c0_i32, %c0_i32_0 : i32, i32
  }
  func.func @transform_4(%arg0: i32) -> (i32, i32) {
    %c0_i32 = arith.constant 0 : i32
    %c0_i32_0 = arith.constant 0 : i32
    %c0_i32_1 = arith.constant 0 : i32
    return %c0_i32, %c0_i32_0 : i32, i32
  }
  func.func @transform_5(%arg0: i32) -> (i32, i32) {
    %c0_i32 = arith.constant 0 : i32
    %c0_i32_0 = arith.constant 0 : i32
    %c0_i32_1 = arith.constant 0 : i32
    return %c0_i32, %c0_i32_0 : i32, i32
  }
  func.func @transform_6(%arg0: i32) -> (i32, i32) {
    %c0_i32 = arith.constant 0 : i32
    %c0_i32_0 = arith.constant 0 : i32
    %c0_i32_1 = arith.constant 0 : i32
    return %c0_i32, %c0_i32_0 : i32, i32
  }
  func.func @transform_7(%arg0: i32) -> (i32, i32) {
    %c0_i32 = arith.constant 0 : i32
    %c0_i32_0 = arith.constant 0 : i32
    %c0_i32_1 = arith.constant 0 : i32
    return %c0_i32, %c0_i32_0 : i32, i32
  }
  func.func @transform_8(%arg0: i32) -> (i32, i32) {
    %c0_i32 = arith.constant 0 : i32
    %c0_i32_0 = arith.constant 0 : i32
    %c0_i32_1 = arith.constant 0 : i32
    return %c0_i32, %c0_i32_0 : i32, i32
  }
  func.func @transform_9(%arg0: i32) -> (i32, i32) {
    %c0_i32 = arith.constant 0 : i32
    %c0_i32_0 = arith.constant 0 : i32
    %c0_i32_1 = arith.constant 0 : i32
    return %c0_i32, %c0_i32_0 : i32, i32
  }
  func.func @transform_10(%arg0: i32) -> (i32, i32) {
    %c0_i32 = arith.constant 0 : i32
    %c0_i32_0 = arith.constant 0 : i32
    return %arg0, %c0_i32 : i32, i32
  }
}

module attributes {stable_mosaic.version = 11 : i64} {
  func.func @_ffb_kernel(%arg0: i32, %arg1: memref<16x32xbf16, #tpu.memory_space<vmem>>, %arg2: memref<32x32xf32, #tpu.memory_space<vmem>>, %arg3: memref<1x32xf32, #tpu.memory_space<vmem>>, %arg4: memref<32x32xf32, #tpu.memory_space<vmem>>, %arg5: memref<1x32xf32, #tpu.memory_space<vmem>>, %arg6: memref<16x32xf32, #tpu.memory_space<vmem>>) attributes {dimension_semantics = [#tpu.dimension_semantics<parallel>], iteration_bounds = array<i64: 1>, scalar_prefetch = 0 : i64, scratch_operands = 0 : i64, tpu.core_type = #tpu.core_type<tc>, window_params = [{transform_indices = @transform_0, window_bounds = array<i64: 16, 32>}, {pipeline_mode = #tpu.pipeline_mode<synchronous>, transform_indices = @transform_1, window_bounds = array<i64: 32, 32>}, {pipeline_mode = #tpu.pipeline_mode<synchronous>, transform_indices = @transform_2, window_bounds = array<i64: 1, 32>}, {pipeline_mode = #tpu.pipeline_mode<synchronous>, transform_indices = @transform_3, window_bounds = array<i64: 32, 32>}, {pipeline_mode = #tpu.pipeline_mode<synchronous>, transform_indices = @transform_4, window_bounds = array<i64: 1, 32>}, {transform_indices = @transform_5, window_bounds = array<i64: 16, 32>}]} {
    %c0 = arith.constant 0 : index
    %c0_0 = arith.constant 0 : index
    %0 = vector.load %arg1[%c0, %c0_0] : memref<16x32xbf16, #tpu.memory_space<vmem>>, vector<16x32xbf16>
    %1 = arith.extf %0 : vector<16x32xbf16> to vector<16x32xf32>
    %c0_1 = arith.constant 0 : index
    %c0_2 = arith.constant 0 : index
    %2 = vector.load %arg2[%c0_1, %c0_2] : memref<32x32xf32, #tpu.memory_space<vmem>>, vector<32x32xf32>
    %cst = arith.constant dense<0.000000e+00> : vector<16x32xf32>
    %3 = tpu.matmul %1, %2, %cst {dimension_numbers = #tpu.dot_dimension_numbers<[1], [0], [0], [1], [0, 0, 1, 1], [], []>} : vector<16x32xf32>, vector<32x32xf32>, vector<16x32xf32> -> vector<16x32xf32>
    %c0_3 = arith.constant 0 : index
    %c0_4 = arith.constant 0 : index
    %4 = vector.load %arg3[%c0_3, %c0_4] : memref<1x32xf32, #tpu.memory_space<vmem>>, vector<1x32xf32>
    %5 = vector.broadcast %4 : vector<1x32xf32> to vector<16x32xf32>
    %6 = arith.addf %3, %5 : vector<16x32xf32>
    %7 = arith.negf %6 : vector<16x32xf32>
    %8 = math.exp %7 : vector<16x32xf32>
    %cst_5 = arith.constant 1.000000e+00 : f32
    %9 = vector.broadcast %cst_5 : f32 to vector<16x32xf32>
    %10 = arith.addf %9, %8 : vector<16x32xf32>
    %11 = arith.divf %9, %10 : vector<16x32xf32>
    %12 = arith.mulf %6, %11 : vector<16x32xf32>
    %c0_6 = arith.constant 0 : index
    %c0_7 = arith.constant 0 : index
    %13 = vector.load %arg4[%c0_6, %c0_7] : memref<32x32xf32, #tpu.memory_space<vmem>>, vector<32x32xf32>
    %cst_8 = arith.constant dense<0.000000e+00> : vector<16x32xf32>
    %14 = tpu.matmul %12, %13, %cst_8 {dimension_numbers = #tpu.dot_dimension_numbers<[1], [0], [0], [1], [0, 0, 1, 1], [], []>} : vector<16x32xf32>, vector<32x32xf32>, vector<16x32xf32> -> vector<16x32xf32>
    %c0_9 = arith.constant 0 : index
    %c0_10 = arith.constant 0 : index
    %15 = vector.load %arg5[%c0_9, %c0_10] : memref<1x32xf32, #tpu.memory_space<vmem>>, vector<1x32xf32>
    %16 = vector.broadcast %15 : vector<1x32xf32> to vector<16x32xf32>
    %17 = arith.addf %14, %16 : vector<16x32xf32>
    %c0_11 = arith.constant 0 : index
    %c0_12 = arith.constant 0 : index
    %18 = vector.load %arg6[%c0_11, %c0_12] : memref<16x32xf32, #tpu.memory_space<vmem>>, vector<16x32xf32>
    tpu.vector_store %arg6[%c0_11, %c0_12], %17 {strides = array<i32>} : memref<16x32xf32, #tpu.memory_space<vmem>>, vector<16x32xf32>,
    return
  }
  func.func @transform_0(%arg0: i32) -> (i32, i32) {
    %c0_i32 = arith.constant 0 : i32
    %c0_i32_0 = arith.constant 0 : i32
    return %arg0, %c0_i32 : i32, i32
  }
  func.func @transform_1(%arg0: i32) -> (i32, i32) {
    %c0_i32 = arith.constant 0 : i32
    %c0_i32_0 = arith.constant 0 : i32
    %c0_i32_1 = arith.constant 0 : i32
    return %c0_i32, %c0_i32_0 : i32, i32
  }
  func.func @transform_2(%arg0: i32) -> (i32, i32) {
    %c0_i32 = arith.constant 0 : i32
    %c0_i32_0 = arith.constant 0 : i32
    %c0_i32_1 = arith.constant 0 : i32
    return %c0_i32, %c0_i32_0 : i32, i32
  }
  func.func @transform_3(%arg0: i32) -> (i32, i32) {
    %c0_i32 = arith.constant 0 : i32
    %c0_i32_0 = arith.constant 0 : i32
    %c0_i32_1 = arith.constant 0 : i32
    return %c0_i32, %c0_i32_0 : i32, i32
  }
  func.func @transform_4(%arg0: i32) -> (i32, i32) {
    %c0_i32 = arith.constant 0 : i32
    %c0_i32_0 = arith.constant 0 : i32
    %c0_i32_1 = arith.constant 0 : i32
    return %c0_i32, %c0_i32_0 : i32, i32
  }
  func.func @transform_5(%arg0: i32) -> (i32, i32) {
    %c0_i32 = arith.constant 0 : i32
    %c0_i32_0 = arith.constant 0 : i32
    return %arg0, %c0_i32 : i32, i32
  }
}

</mosaic_0001>

<llo_original>
// kernel: processor_forward.10
$region0: #{processor_forward.10}
  #allocation0 [shape = 'u32[]', space=smem, size = 0x4, offset = 0x4, fixed_abs, tag = 'smem constant byte address 0x4 - core index']
  #allocation1 [shape = 'u32[144,128]{1,0:T(1,128)}', space=vmem, size = 0x12000, scoped, tag = 'internal scratch']
  %s0 = inlined_call_operand.vmem [shape: f32[40,4], index: 0, kind: input, shape index: {}]
  %s1 = inlined_call_operand.vmem [shape: f32[4,32], index: 1, kind: input, shape index: {}]
  %s2 = inlined_call_operand.vmem [shape: f32[1,32], index: 2, kind: input, shape index: {}]
  %s3 = inlined_call_operand.vmem [shape: f32[32,32], index: 3, kind: input, shape index: {}]
  %s4 = inlined_call_operand.vmem [shape: f32[1,32], index: 4, kind: input, shape index: {}]
  %s5 = inlined_call_operand.vmem [shape: f32[1,32], index: 5, kind: input, shape index: {}]
  %s6 = inlined_call_operand.vmem [shape: f32[1,32], index: 6, kind: input, shape index: {}]
  %s7 = inlined_call_operand.vmem [shape: bf16[40,32], index: 7, kind: output, shape index: {}]
  %s8 = sld [smem:[#allocation0]]
  $region38: #{processor_forward.10} parent=0
    _
  %s10 = ssub.s32 1, %s8
  %s11 = scalar_select 0, %s10, %s8
  // Predicated region
  $region2: #{processor_forward.10} parent=0 // pred_check
    _
  $region3: #{processor_forward.10} parent=0 // pred_check_branch
    %13 = sbr.rel (0) target = $region5
  $region4: #{processor_forward.10} parent=0 // pred_region
    _
  $region5: #{processor_forward.10} parent=0 // pred_fallthru
    _
  // Predicated region
  $region6: #{processor_forward.10} parent=0 // pred_check
    _
  $region7: #{processor_forward.10} parent=0 // pred_check_branch
    %15 = sbr.rel (0) target = $region9
  $region8: #{processor_forward.10} parent=0 // pred_region
    _
  $region9: #{processor_forward.10} parent=0 // pred_fallthru
    _
  // Predicated region
  $region10: #{processor_forward.10} parent=0 // pred_check
    _
  $region11: #{processor_forward.10} parent=0 // pred_check_branch
    %17 = sbr.rel (0) target = $region13
  $region12: #{processor_forward.10} parent=0 // pred_region
    _
  $region13: #{processor_forward.10} parent=0 // pred_fallthru
    _
  // Predicated region
  $region14: #{processor_forward.10} parent=0 // pred_check
    _
  $region15: #{processor_forward.10} parent=0 // pred_check_branch
    %19 = sbr.rel (0) target = $region17
  $region16: #{processor_forward.10} parent=0 // pred_region
    _
  $region17: #{processor_forward.10} parent=0 // pred_fallthru
    _
  // Predicated region
  $region18: #{processor_forward.10} parent=0 // pred_check
    _
  $region19: #{processor_forward.10} parent=0 // pred_check_branch
    %21 = sbr.rel (0) target = $region21
  $region20: #{processor_forward.10} parent=0 // pred_region
    _
  $region21: #{processor_forward.10} parent=0 // pred_fallthru
    _
  // Predicated region
  $region22: #{processor_forward.10} parent=0 // pred_check
    _
  $region23: #{processor_forward.10} parent=0 // pred_check_branch
    %23 = sbr.rel (0) target = $region25
  $region24: #{processor_forward.10} parent=0 // pred_region
    _
  $region25: #{processor_forward.10} parent=0 // pred_fallthru
    _
  // Predicated region
  $region26: #{processor_forward.10} parent=0 // pred_check
    _
  $region27: #{processor_forward.10} parent=0 // pred_check_branch
    %25 = sbr.rel (0) target = $region29
  $region28: #{processor_forward.10} parent=0 // pred_region
    _
  $region29: #{processor_forward.10} parent=0 // pred_fallthru
    _
  %v26 = vld [vmem:[%s0] sm:$0xff]
  %v27 = vld [vmem:[%s0 + $0x8] sm:$0xff]
  %v28 = vld [vmem:[%s0 + $0x10] sm:$0xff]
  %v29 = vld [vmem:[%s0 + $0x18] sm:$0xff]
  %v30 = vld [vmem:[%s0 + $0x20] sm:$0xff]
  %v31 = vld [vmem:[%s1] sm:$0xf]
  %v32 = vld [vmem:[%s2] sm:$0x1]
  %v34 = vlaneseq
  %v35 = vshrl.u32 %v34, 7
  %v36 = vsub.s32 0, %v35
  %v37 = vrot.slane %v32, %v36
  %vm39 = vcmask 31744
  %v41 = vsel %vm39, %v26, 0
  %v44 = vsel %vm39, %v27, 0
  %v47 = vsel %vm39, %v28, 0
  %v50 = vsel %vm39, %v29, 0
  %v53 = vsel %vm39, %v30, 0
  %vm55 = vcmask 1043456
  %v57 = vsel %vm55, %v31, 0
  %59 = vmatprep.subr.mxu0 0.0
  %60 = vmatpush1.msra.mxu0 %v57
  %61 = vmatprep.subr.mxu0 0.0
  %62 = vmatpush1.msra.mxu0 0.0
  %63 = vmatprep.subr.mxu0 0.0
  %64 = vmatpush1.msra.mxu0 0.0
  %65 = vmatprep.subr.mxu0 0.0
  %66 = vmatpush1.msra.mxu0 0.0
  %67 = vmatprep.subr.mxu0 0.0
  %68 = vmatpush1.msra.mxu0 0.0
  %69 = vmatprep.subr.mxu0 0.0
  %70 = vmatpush1.msra.mxu0 0.0
  %71 = vmatprep.subr.mxu0 0.0
  %72 = vmatpush1.msra.mxu0 0.0
  %73 = vmatprep.subr.mxu0 0.0
  %74 = vmatpush1.msra.mxu0 0.0
  %75 = vmatprep.subr.mxu0 0.0
  %76 = vmatpush1.msra.mxu0 0.0
  %77 = vmatprep.subr.mxu0 0.0
  %78 = vmatpush1.msra.mxu0 0.0
  %79 = vmatprep.subr.mxu0 0.0
  %80 = vmatpush1.msra.mxu0 0.0
  %81 = vmatprep.subr.mxu0 0.0
  %82 = vmatpush1.msra.mxu0 0.0
  %83 = vmatprep.subr.mxu0 0.0
  %84 = vmatpush1.msra.mxu0 0.0
  %85 = vmatprep.subr.mxu0 0.0
  %86 = vmatpush1.msra.mxu0 0.0
  %87 = vmatprep.subr.mxu0 0.0
  %88 = vmatpush1.msra.mxu0 0.0
  %89 = vmatprep.subr.mxu0 0.0
  %90 = vmatpush1.msra.mxu0 0.0
  %91 = vmatprep.subr.mxu0 0.0
  %92 = vmatpush1.msra.mxu0 0.0
  %93 = vmatprep.subr.mxu0 0.0
  %94 = vmatpush1.msra.mxu0 0.0
  %95 = vmatprep.subr.mxu0 0.0
  %96 = vmatpush1.msra.mxu0 0.0
  %97 = vmatprep.subr.mxu0 0.0
  %98 = vmatpush1.msra.mxu0 0.0
  %99 = vmatprep.subr.mxu0 0.0
  %100 = vmatpush1.msra.mxu0 0.0
  %101 = vmatprep.subr.mxu0 0.0
  %102 = vmatpush1.msra.mxu0 0.0
  %103 = vmatprep.subr.mxu0 0.0
  %104 = vmatpush1.msra.mxu0 0.0
  %105 = vmatprep.subr.mxu0 0.0
  %106 = vmatpush1.msra.mxu0 0.0
  %107 = vmatprep.subr.mxu0 0.0
  %108 = vmatpush1.msra.mxu0 0.0
  %109 = vmatprep.subr.mxu0 0.0
  %110 = vmatpush1.msra.mxu0 0.0
  %111 = vmatprep.subr.mxu0 0.0
  %112 = vmatpush1.msra.mxu0 0.0
  %113 = vmatprep.subr.mxu0 0.0
  %114 = vmatpush1.msra.mxu0 0.0
  %115 = vmatprep.subr.mxu0 0.0
  %116 = vmatpush1.msra.mxu0 0.0
  %117 = vmatprep.subr.mxu0 0.0
  %118 = vmatpush1.msra.mxu0 0.0
  %119 = vmatprep.subr.mxu0 0.0
  %120 = vmatpush1.msra.mxu0 0.0
  %121 = vmatprep.subr.mxu0 0.0
  %122 = vmatpush1.msra.mxu0 0.0
  %123 = vmatprep.mubr.f32.mxu0 0.0
  %124 = vmatmul.mubr.f32.gmra.mrb[0].mxu0 %v41
  %v125 = vpop.f32.mrb[0].mxu0
  %v126 = vadd.f32 %v37, %v125
  %v127 = vpop.f32.mrb[0].mxu0
  %128 = vmatprep.mubr.f32.mxu0 0.0
  %129 = vmatmul.mubr.f32.gmra.mrb[0].mxu0 %v44
  %v130 = vpop.f32.mrb[0].mxu0
  %v131 = vadd.f32 %v37, %v130
  %v132 = vpop.f32.mrb[0].mxu0
  %133 = vmatprep.mubr.f32.mxu0 0.0
  %134 = vmatmul.mubr.f32.gmra.mrb[0].mxu0 %v47
  %v135 = vpop.f32.mrb[0].mxu0
  %v136 = vadd.f32 %v37, %v135
  %v137 = vpop.f32.mrb[0].mxu0
  %138 = vmatprep.mubr.f32.mxu0 0.0
  %139 = vmatmul.mubr.f32.gmra.mrb[0].mxu0 %v50
  %v140 = vpop.f32.mrb[0].mxu0
  %v141 = vadd.f32 %v37, %v140
  %v142 = vpop.f32.mrb[0].mxu0
  %143 = vmatprep.mubr.f32.mxu0 0.0
  %144 = vmatmul.mubr.f32.gmra.mrb[0].mxu0 %v53
  %v145 = vpop.f32.mrb[0].mxu0
  %v146 = vadd.f32 %v37, %v145
  %v147 = vpop.f32.mrb[0].mxu0
  %148 = vdwg.mxu0
  %v149 = vxor.u32 %v126, 2147483648
  %v150 = vxor.u32 %v131, 2147483648
  %v151 = vxor.u32 %v136, 2147483648
  %v152 = vxor.u32 %v141, 2147483648
  %v153 = vxor.u32 %v146, 2147483648
  %v154 = vmul.f32 %v149, 1.442695
  %v155 = vpow.pop %v154
  %v156 = vmul.f32 %v150, 1.442695
  %v157 = vpow.pop %v156
  %v158 = vmul.f32 %v151, 1.442695
  %v159 = vpow.pop %v158
  %v160 = vmul.f32 %v152, 1.442695
  %v161 = vpow.pop %v160
  %v162 = vmul.f32 %v153, 1.442695
  %v163 = vpow.pop %v162
  %v164 = vadd.f32 %v155, 1.0
  %v165 = vadd.f32 %v157, 1.0
  %v166 = vadd.f32 %v159, 1.0
  %v167 = vadd.f32 %v161, 1.0
  %v168 = vadd.f32 %v163, 1.0
  %v169 = vrcp.pop %v164
  %v170 = vmul.f32 1.0, %v169
  %v171 = vrcp.pop %v165
  %v172 = vmul.f32 1.0, %v171
  %v173 = vrcp.pop %v166
  %v174 = vmul.f32 1.0, %v173
  %v175 = vrcp.pop %v167
  %v176 = vmul.f32 1.0, %v175
  %v177 = vrcp.pop %v168
  %v178 = vmul.f32 1.0, %v177
  %v179 = vmul.f32 %v126, %v170
  %v180 = vmul.f32 %v131, %v172
  %v181 = vmul.f32 %v136, %v174
  %v182 = vmul.f32 %v141, %v176
  %v183 = vmul.f32 %v146, %v178
  %v184 = vld [vmem:[%s3] sm:$0xff]
  %v185 = vld [vmem:[%s3 + $0x8] sm:$0xff]
  %v186 = vld [vmem:[%s3 + $0x10] sm:$0xff]
  %v187 = vld [vmem:[%s3 + $0x18] sm:$0xff]
  %v188 = vld [vmem:[%s4] sm:$0x1]
  %v190 = vlaneseq
  %v191 = vshrl.u32 %v190, 7
  %v192 = vsub.s32 0, %v191
  %v193 = vrot.slane %v188, %v192
  %vm195 = vcmask 261120
  %v197 = vsel %vm195, %v179, 0
  %v200 = vsel %vm195, %v180, 0
  %v203 = vsel %vm195, %v181, 0
  %v206 = vsel %vm195, %v182, 0
  %v209 = vsel %vm195, %v183, 0
  %211 = vmatprep.subr.mxu0 0.0
  %212 = vmatpush1.msra.mxu0 %v184
  %213 = vmatprep.subr.mxu0 0.0
  %214 = vmatpush1.msra.mxu0 %v185
  %215 = vmatprep.subr.mxu0 0.0
  %216 = vmatpush1.msra.mxu0 %v186
  %217 = vmatprep.subr.mxu0 0.0
  %218 = vmatpush1.msra.mxu0 %v187
  %219 = vmatprep.subr.mxu0 0.0
  %220 = vmatpush1.msra.mxu0 0.0
  %221 = vmatprep.subr.mxu0 0.0
  %222 = vmatpush1.msra.mxu0 0.0
  %223 = vmatprep.subr.mxu0 0.0
  %224 = vmatpush1.msra.mxu0 0.0
  %225 = vmatprep.subr.mxu0 0.0
  %226 = vmatpush1.msra.mxu0 0.0
  %227 = vmatprep.subr.mxu0 0.0
  %228 = vmatpush1.msra.mxu0 0.0
  %229 = vmatprep.subr.mxu0 0.0
  %230 = vmatpush1.msra.mxu0 0.0
  %231 = vmatprep.subr.mxu0 0.0
  %232 = vmatpush1.msra.mxu0 0.0
  %233 = vmatprep.subr.mxu0 0.0
  %234 = vmatpush1.msra.mxu0 0.0
  %235 = vmatprep.subr.mxu0 0.0
  %236 = vmatpush1.msra.mxu0 0.0
  %237 = vmatprep.subr.mxu0 0.0
  %238 = vmatpush1.msra.mxu0 0.0
  %239 = vmatprep.subr.mxu0 0.0
  %240 = vmatpush1.msra.mxu0 0.0
  %241 = vmatprep.subr.mxu0 0.0
  %242 = vmatpush1.msra.mxu0 0.0
  %243 = vmatprep.subr.mxu0 0.0
  %244 = vmatpush1.msra.mxu0 0.0
  %245 = vmatprep.subr.mxu0 0.0
  %246 = vmatpush1.msra.mxu0 0.0
  %247 = vmatprep.subr.mxu0 0.0
  %248 = vmatpush1.msra.mxu0 0.0
  %249 = vmatprep.subr.mxu0 0.0
  %250 = vmatpush1.msra.mxu0 0.0
  %251 = vmatprep.subr.mxu0 0.0
  %252 = vmatpush1.msra.mxu0 0.0
  %253 = vmatprep.subr.mxu0 0.0
  %254 = vmatpush1.msra.mxu0 0.0
  %255 = vmatprep.subr.mxu0 0.0
  %256 = vmatpush1.msra.mxu0 0.0
  %257 = vmatprep.subr.mxu0 0.0
  %258 = vmatpush1.msra.mxu0 0.0
  %259 = vmatprep.subr.mxu0 0.0
  %260 = vmatpush1.msra.mxu0 0.0
  %261 = vmatprep.subr.mxu0 0.0
  %262 = vmatpush1.msra.mxu0 0.0
  %263 = vmatprep.subr.mxu0 0.0
  %264 = vmatpush1.msra.mxu0 0.0
  %265 = vmatprep.subr.mxu0 0.0
  %266 = vmatpush1.msra.mxu0 0.0
  %267 = vmatprep.subr.mxu0 0.0
  %268 = vmatpush1.msra.mxu0 0.0
  %269 = vmatprep.subr.mxu0 0.0
  %270 = vmatpush1.msra.mxu0 0.0
  %271 = vmatprep.subr.mxu0 0.0
  %272 = vmatpush1.msra.mxu0 0.0
  %273 = vmatprep.subr.mxu0 0.0
  %274 = vmatpush1.msra.mxu0 0.0
  %275 = vmatprep.mubr.f32.mxu0 0.0
  %276 = vmatmul.mubr.f32.gmra.mrb[0].mxu0 %v197
  %v277 = vpop.f32.mrb[0].mxu0
  %v278 = vadd.f32 %v193, %v277
  %v279 = vpop.f32.mrb[0].mxu0
  %280 = vmatprep.mubr.f32.mxu0 0.0
  %281 = vmatmul.mubr.f32.gmra.mrb[0].mxu0 %v200
  %v282 = vpop.f32.mrb[0].mxu0
  %v283 = vadd.f32 %v193, %v282
  %v284 = vpop.f32.mrb[0].mxu0
  %285 = vmatprep.mubr.f32.mxu0 0.0
  %286 = vmatmul.mubr.f32.gmra.mrb[0].mxu0 %v203
  %v287 = vpop.f32.mrb[0].mxu0
  %v288 = vadd.f32 %v193, %v287
  %v289 = vpop.f32.mrb[0].mxu0
  %290 = vmatprep.mubr.f32.mxu0 0.0
  %291 = vmatmul.mubr.f32.gmra.mrb[0].mxu0 %v206
  %v292 = vpop.f32.mrb[0].mxu0
  %v293 = vadd.f32 %v193, %v292
  %v294 = vpop.f32.mrb[0].mxu0
  %295 = vmatprep.mubr.f32.mxu0 0.0
  %296 = vmatmul.mubr.f32.gmra.mrb[0].mxu0 %v209
  %v297 = vpop.f32.mrb[0].mxu0
  %v298 = vadd.f32 %v193, %v297
  %v299 = vpop.f32.mrb[0].mxu0
  %300 = vdwg.mxu0
  %v301 = vld [vmem:[%s5] sm:$0x1]
  %v302 = vld [vmem:[%s6] sm:$0x1]
  %v303 = vsel %vm195, %v278, 0.0
  %304 = vadd.xlane.f32.xlu0 %v303
  %v305 = vpop.xlane.xlu0 %304
  %v306 = vsel %vm195, %v283, 0.0
  %307 = vadd.xlane.f32.xlu0 %v306
  %v308 = vpop.xlane.xlu0 %307
  %v309 = vsel %vm195, %v288, 0.0
  %310 = vadd.xlane.f32.xlu0 %v309
  %v311 = vpop.xlane.xlu0 %310
  %v312 = vsel %vm195, %v293, 0.0
  %313 = vadd.xlane.f32.xlu0 %v312
  %v314 = vpop.xlane.xlu0 %313
  %v315 = vsel %vm195, %v298, 0.0
  %316 = vadd.xlane.f32.xlu0 %v315
  %v317 = vpop.xlane.xlu0 %316
  %v318 = vrcp.pop 32.0
  %v319 = vmul.f32 %v305, %v318
  %v320 = vmul.f32 %v308, %v318
  %v321 = vmul.f32 %v311, %v318
  %v322 = vmul.f32 %v314, %v318
  %v323 = vmul.f32 %v317, %v318
  %v324 = vsub.f32 %v278, %v319
  %v325 = vsub.f32 %v283, %v320
  %v326 = vsub.f32 %v288, %v321
  %v327 = vsub.f32 %v293, %v322
  %v328 = vsub.f32 %v298, %v323
  %v329 = vmul.f32 %v324, %v324
  %v330 = vmul.f32 %v325, %v325
  %v331 = vmul.f32 %v326, %v326
  %v332 = vmul.f32 %v327, %v327
  %v333 = vmul.f32 %v328, %v328
  %v334 = vsel %vm195, %v329, 0.0
  %335 = vadd.xlane.f32.xlu0 %v334
  %v336 = vpop.xlane.xlu0 %335
  %v337 = vsel %vm195, %v330, 0.0
  %338 = vadd.xlane.f32.xlu0 %v337
  %v339 = vpop.xlane.xlu0 %338
  %v340 = vsel %vm195, %v331, 0.0
  %341 = vadd.xlane.f32.xlu0 %v340
  %v342 = vpop.xlane.xlu0 %341
  %v343 = vsel %vm195, %v332, 0.0
  %344 = vadd.xlane.f32.xlu0 %v343
  %v345 = vpop.xlane.xlu0 %344
  %v346 = vsel %vm195, %v333, 0.0
  %347 = vadd.xlane.f32.xlu0 %v346
  %v348 = vpop.xlane.xlu0 %347
  %v349 = vmul.f32 %v336, %v318
  %v350 = vmul.f32 %v339, %v318
  %v351 = vmul.f32 %v342, %v318
  %v352 = vmul.f32 %v345, %v318
  %v353 = vmul.f32 %v348, %v318
  %v354 = vadd.f32 %v349, 1e-05
  %v355 = vadd.f32 %v350, 1e-05
  %v356 = vadd.f32 %v351, 1e-05
  %v357 = vadd.f32 %v352, 1e-05
  %v358 = vadd.f32 %v353, 1e-05
  %v359 = vrsqrt.pop %v354
  %v360 = vrsqrt.pop %v355
  %v361 = vrsqrt.pop %v356
  %v362 = vrsqrt.pop %v357
  %v363 = vrsqrt.pop %v358
  %v364 = vmul.f32 %v324, %v359
  %v365 = vmul.f32 %v325, %v360
  %v366 = vmul.f32 %v326, %v361
  %v367 = vmul.f32 %v327, %v362
  %v368 = vmul.f32 %v328, %v363
  %v370 = vlaneseq
  %v371 = vshrl.u32 %v370, 7
  %v372 = vsub.s32 0, %v371
  %v373 = vrot.slane %v301, %v372
  %v375 = vmul.f32 %v364, %v373
  %v376 = vmul.f32 %v365, %v373
  %v377 = vmul.f32 %v366, %v373
  %v378 = vmul.f32 %v367, %v373
  %v379 = vmul.f32 %v368, %v373
  %v381 = vlaneseq
  %v382 = vshrl.u32 %v381, 7
  %v383 = vsub.s32 0, %v382
  %v384 = vrot.slane %v302, %v383
  %v386 = vadd.f32 %v375, %v384
  %v387 = vadd.f32 %v376, %v384
  %v388 = vadd.f32 %v377, %v384
  %v389 = vadd.f32 %v378, %v384
  %v390 = vadd.f32 %v379, %v384
  %v391 = vpack.c.bf16 %v387, %v386
  %v392 = vpack.c.bf16 %v389, %v388
  %v393 = vpack.c.bf16 %v390, %v390
  %v397 = vunpack.c.l.b16 %v391
  %v398 = vunpack.c.h.b16 %v391
  %v399 = vunpack.c.l.b16 %v392
  %v400 = vunpack.c.h.b16 %v392
  %v401 = vunpack.c.l.b16 %v393
  %v402 = vpack.c.b16 %v397, %v397
  %v403 = vpack.c.b16 %v398, %v398
  %v404 = vpack.c.b16 %v399, %v399
  %v405 = vpack.c.b16 %v400, %v400
  %v406 = vpack.c.b16 %v401, %v401
  %vm412 = vcmask 257024
  %413 = vst.msk [vmem:[%s7] sm:$0xf] %vm412, %v402
  %414 = vst.msk [vmem:[%s7 + $0x4] sm:$0xf] %vm412, %v403
  %415 = vst.msk [vmem:[%s7 + $0x8] sm:$0xf] %vm412, %v404
  %416 = vst.msk [vmem:[%s7 + $0xc] sm:$0xf] %vm412, %v405
  %417 = vst.msk [vmem:[%s7 + $0x10] sm:$0xf] %vm412, %v406
  // Predicated region
  $region30: #{processor_forward.10} parent=0 // pred_check
    _
  $region31: #{processor_forward.10} parent=0 // pred_check_branch
    %419 = sbr.rel (0) target = $region33
  $region32: #{processor_forward.10} parent=0 // pred_region
    _
  $region33: #{processor_forward.10} parent=0 // pred_fallthru
    _
  // Predicated region
  $region34: #{processor_forward.10} parent=0 // pred_check
    _
  $region35: #{processor_forward.10} parent=0 // pred_check_branch
    %421 = sbr.rel (0) target = $region37
  $region36: #{processor_forward.10} parent=0 // pred_region
    _
  $region37: #{processor_forward.10} parent=0 // pred_fallthru
    _

// kernel: processor_forward.11
$region0: #{processor_forward.11}
  #allocation0 [shape = 'u32[]', space=smem, size = 0x4, offset = 0x4, fixed_abs, tag = 'smem constant byte address 0x4 - core index']
  #allocation1 [shape = 'u32[144,128]{1,0:T(1,128)}', space=vmem, size = 0x12000, scoped, tag = 'internal scratch']
  %s0 = inlined_call_operand.vmem [shape: bf16[40,32], index: 0, kind: input, shape index: {}, may-alias: {0,10}]
  %s1 = inlined_call_operand.vmem [shape: bf16[40,64], index: 1, kind: input, shape index: {}]
  %s2 = inlined_call_operand.vmem [shape: f32[32,32], index: 2, kind: input, shape index: {}]
  %s3 = inlined_call_operand.vmem [shape: f32[64,32], index: 3, kind: input, shape index: {}]
  %s4 = inlined_call_operand.vmem [shape: f32[1,32], index: 4, kind: input, shape index: {}]
  %s5 = inlined_call_operand.vmem [shape: f32[32,32], index: 5, kind: input, shape index: {}]
  %s6 = inlined_call_operand.vmem [shape: f32[1,32], index: 6, kind: input, shape index: {}]
  %s7 = inlined_call_operand.vmem [shape: f32[1,32], index: 7, kind: input, shape index: {}]
  %s8 = inlined_call_operand.vmem [shape: f32[1,32], index: 8, kind: input, shape index: {}]
  %s9 = inlined_call_operand.vmem [shape: bf16[40,32], index: 9, kind: output, shape index: {0}]
  %s10 = inlined_call_operand.vmem [shape: bf16[40,32], index: 10, kind: output, shape index: {1}, may-alias: {0,10}]
  %11 = xla_tuple %s9, %s10
  %s12 = sld [smem:[#allocation0]]
  $region54: #{processor_forward.11} parent=0
    _
  %s14 = ssub.s32 1, %s12
  %s15 = scalar_select 0, %s14, %s12
  // Predicated region
  $region2: #{processor_forward.11} parent=0 // pred_check
    _
  $region3: #{processor_forward.11} parent=0 // pred_check_branch
    %17 = sbr.rel (0) target = $region5
  $region4: #{processor_forward.11} parent=0 // pred_region
    _
  $region5: #{processor_forward.11} parent=0 // pred_fallthru
    _
  // Predicated region
  $region6: #{processor_forward.11} parent=0 // pred_check
    _
  $region7: #{processor_forward.11} parent=0 // pred_check_branch
    %19 = sbr.rel (0) target = $region9
  $region8: #{processor_forward.11} parent=0 // pred_region
    _
  $region9: #{processor_forward.11} parent=0 // pred_fallthru
    _
  // Predicated region
  $region10: #{processor_forward.11} parent=0 // pred_check
    _
  $region11: #{processor_forward.11} parent=0 // pred_check_branch
    %21 = sbr.rel (0) target = $region13
  $region12: #{processor_forward.11} parent=0 // pred_region
    _
  $region13: #{processor_forward.11} parent=0 // pred_fallthru
    _
  // Predicated region
  $region14: #{processor_forward.11} parent=0 // pred_check
    _
  $region15: #{processor_forward.11} parent=0 // pred_check_branch
    %23 = sbr.rel (0) target = $region17
  $region16: #{processor_forward.11} parent=0 // pred_region
    _
  $region17: #{processor_forward.11} parent=0 // pred_fallthru
    _
  // Predicated region
  $region18: #{processor_forward.11} parent=0 // pred_check
    _
  $region19: #{processor_forward.11} parent=0 // pred_check_branch
    %25 = sbr.rel (0) target = $region21
  $region20: #{processor_forward.11} parent=0 // pred_region
    _
  $region21: #{processor_forward.11} parent=0 // pred_fallthru
    _
  // Predicated region
  $region22: #{processor_forward.11} parent=0 // pred_check
    _
  $region23: #{processor_forward.11} parent=0 // pred_check_branch
    %27 = sbr.rel (0) target = $region25
  $region24: #{processor_forward.11} parent=0 // pred_region
    _
  $region25: #{processor_forward.11} parent=0 // pred_fallthru
    _
  // Predicated region
  $region26: #{processor_forward.11} parent=0 // pred_check
    _
  $region27: #{processor_forward.11} parent=0 // pred_check_branch
    %29 = sbr.rel (0) target = $region29
  $region28: #{processor_forward.11} parent=0 // pred_region
    _
  $region29: #{processor_forward.11} parent=0 // pred_fallthru
    _
  // Predicated region
  $region30: #{processor_forward.11} parent=0 // pred_check
    _
  $region31: #{processor_forward.11} parent=0 // pred_check_branch
    %31 = sbr.rel (0) target = $region33
  $region32: #{processor_forward.11} parent=0 // pred_region
    _
  $region33: #{processor_forward.11} parent=0 // pred_fallthru
    _
  // Predicated region
  $region34: #{processor_forward.11} parent=0 // pred_check
    _
  $region35: #{processor_forward.11} parent=0 // pred_check_branch
    %33 = sbr.rel (0) target = $region37
  $region36: #{processor_forward.11} parent=0 // pred_region
    _
  $region37: #{processor_forward.11} parent=0 // pred_fallthru
    _
  %v34 = vld [vmem:[%s0] sm:$0xf]
  %v35 = vld [vmem:[%s0 + $0x4] sm:$0xf]
  %v36 = vld [vmem:[%s0 + $0x8] sm:$0xf]
  %v37 = vld [vmem:[%s0 + $0xc] sm:$0xf]
  %v38 = vld [vmem:[%s0 + $0x10] sm:$0xf]
  %v39 = vunpack.c.l.bf16 %v34
  %v40 = vunpack.c.l.bf16 %v35
  %v41 = vunpack.c.l.bf16 %v36
  %v42 = vunpack.c.l.bf16 %v37
  %v43 = vunpack.c.l.bf16 %v38
  %v44 = vld [vmem:[%s1] sm:$0xf]
  %v45 = vld [vmem:[%s1 + $0x4] sm:$0xf]
  %v46 = vld [vmem:[%s1 + $0x8] sm:$0xf]
  %v47 = vld [vmem:[%s1 + $0xc] sm:$0xf]
  %v48 = vld [vmem:[%s1 + $0x10] sm:$0xf]
  %v49 = vunpack.c.l.bf16 %v44
  %v50 = vunpack.c.l.bf16 %v45
  %v51 = vunpack.c.l.bf16 %v46
  %v52 = vunpack.c.l.bf16 %v47
  %v53 = vunpack.c.l.bf16 %v48
  %v54 = vld [vmem:[%s2] sm:$0xff]
  %v55 = vld [vmem:[%s2 + $0x8] sm:$0xff]
  %v56 = vld [vmem:[%s2 + $0x10] sm:$0xff]
  %v57 = vld [vmem:[%s2 + $0x18] sm:$0xff]
  %v58 = vld [vmem:[%s3] sm:$0xff]
  %v59 = vld [vmem:[%s3 + $0x8] sm:$0xff]
  %v60 = vld [vmem:[%s3 + $0x10] sm:$0xff]
  %v61 = vld [vmem:[%s3 + $0x18] sm:$0xff]
  %v62 = vld [vmem:[%s3 + $0x20] sm:$0xff]
  %v63 = vld [vmem:[%s3 + $0x28] sm:$0xff]
  %v64 = vld [vmem:[%s3 + $0x30] sm:$0xff]
  %v65 = vld [vmem:[%s3 + $0x38] sm:$0xff]
  %vm66 = vcmask 523264
  %v68 = vsel %vm66, %v49, 0
  %v71 = vsel %vm66, %v50, 0
  %v74 = vsel %vm66, %v51, 0
  %v77 = vsel %vm66, %v52, 0
  %v80 = vsel %vm66, %v53, 0
  %82 = vmatprep.subr.mxu0 0.0
  %83 = vmatpush1.msra.mxu0 %v58
  %84 = vmatprep.subr.mxu0 0.0
  %85 = vmatpush1.msra.mxu0 %v59
  %86 = vmatprep.subr.mxu0 0.0
  %87 = vmatpush1.msra.mxu0 %v60
  %88 = vmatprep.subr.mxu0 0.0
  %89 = vmatpush1.msra.mxu0 %v61
  %90 = vmatprep.subr.mxu0 0.0
  %91 = vmatpush1.msra.mxu0 %v62
  %92 = vmatprep.subr.mxu0 0.0
  %93 = vmatpush1.msra.mxu0 %v63
  %94 = vmatprep.subr.mxu0 0.0
  %95 = vmatpush1.msra.mxu0 %v64
  %96 = vmatprep.subr.mxu0 0.0
  %97 = vmatpush1.msra.mxu0 %v65
  %98 = vmatprep.subr.mxu0 0.0
  %99 = vmatpush1.msra.mxu0 0.0
  %100 = vmatprep.subr.mxu0 0.0
  %101 = vmatpush1.msra.mxu0 0.0
  %102 = vmatprep.subr.mxu0 0.0
  %103 = vmatpush1.msra.mxu0 0.0
  %104 = vmatprep.subr.mxu0 0.0
  %105 = vmatpush1.msra.mxu0 0.0
  %106 = vmatprep.subr.mxu0 0.0
  %107 = vmatpush1.msra.mxu0 0.0
  %108 = vmatprep.subr.mxu0 0.0
  %109 = vmatpush1.msra.mxu0 0.0
  %110 = vmatprep.subr.mxu0 0.0
  %111 = vmatpush1.msra.mxu0 0.0
  %112 = vmatprep.subr.mxu0 0.0
  %113 = vmatpush1.msra.mxu0 0.0
  %114 = vmatprep.subr.mxu0 0.0
  %115 = vmatpush1.msra.mxu0 0.0
  %116 = vmatprep.subr.mxu0 0.0
  %117 = vmatpush1.msra.mxu0 0.0
  %118 = vmatprep.subr.mxu0 0.0
  %119 = vmatpush1.msra.mxu0 0.0
  %120 = vmatprep.subr.mxu0 0.0
  %121 = vmatpush1.msra.mxu0 0.0
  %122 = vmatprep.subr.mxu0 0.0
  %123 = vmatpush1.msra.mxu0 0.0
  %124 = vmatprep.subr.mxu0 0.0
  %125 = vmatpush1.msra.mxu0 0.0
  %126 = vmatprep.subr.mxu0 0.0
  %127 = vmatpush1.msra.mxu0 0.0
  %128 = vmatprep.subr.mxu0 0.0
  %129 = vmatpush1.msra.mxu0 0.0
  %130 = vmatprep.subr.mxu0 0.0
  %131 = vmatpush1.msra.mxu0 0.0
  %132 = vmatprep.subr.mxu0 0.0
  %133 = vmatpush1.msra.mxu0 0.0
  %134 = vmatprep.subr.mxu0 0.0
  %135 = vmatpush1.msra.mxu0 0.0
  %136 = vmatprep.subr.mxu0 0.0
  %137 = vmatpush1.msra.mxu0 0.0
  %138 = vmatprep.subr.mxu0 0.0
  %139 = vmatpush1.msra.mxu0 0.0
  %140 = vmatprep.subr.mxu0 0.0
  %141 = vmatpush1.msra.mxu0 0.0
  %142 = vmatprep.subr.mxu0 0.0
  %143 = vmatpush1.msra.mxu0 0.0
  %144 = vmatprep.subr.mxu0 0.0
  %145 = vmatpush1.msra.mxu0 0.0
  %146 = vmatprep.mubr.f32.mxu0 0.0
  %147 = vmatmul.mubr.f32.gmra.mrb[0].mxu0 %v68
  %v148 = vpop.f32.mrb[0].mxu0
  %v149 = vadd.f32 0.0, %v148
  %v150 = vpop.f32.mrb[0].mxu0
  %151 = vmatprep.mubr.f32.mxu0 0.0
  %152 = vmatmul.mubr.f32.gmra.mrb[0].mxu0 %v71
  %v153 = vpop.f32.mrb[0].mxu0
  %v154 = vadd.f32 0.0, %v153
  %v155 = vpop.f32.mrb[0].mxu0
  %156 = vmatprep.mubr.f32.mxu0 0.0
  %157 = vmatmul.mubr.f32.gmra.mrb[0].mxu0 %v74
  %v158 = vpop.f32.mrb[0].mxu0
  %v159 = vadd.f32 0.0, %v158
  %v160 = vpop.f32.mrb[0].mxu0
  %161 = vmatprep.mubr.f32.mxu0 0.0
  %162 = vmatmul.mubr.f32.gmra.mrb[0].mxu0 %v77
  %v163 = vpop.f32.mrb[0].mxu0
  %v164 = vadd.f32 0.0, %v163
  %v165 = vpop.f32.mrb[0].mxu0
  %166 = vmatprep.mubr.f32.mxu0 0.0
  %167 = vmatmul.mubr.f32.gmra.mrb[0].mxu0 %v80
  %v168 = vpop.f32.mrb[0].mxu0
  %v169 = vadd.f32 0.0, %v168
  %v170 = vpop.f32.mrb[0].mxu0
  %171 = vdwg.mxu0
  %vm172 = vcmask 261120
  %v174 = vsel %vm172, %v39, 0
  %v177 = vsel %vm172, %v40, 0
  %v180 = vsel %vm172, %v41, 0
  %v183 = vsel %vm172, %v42, 0
  %v186 = vsel %vm172, %v43, 0
  %188 = vmatprep.subr.mxu0 0.0
  %189 = vmatpush1.msra.mxu0 %v54
  %190 = vmatprep.subr.mxu0 0.0
  %191 = vmatpush1.msra.mxu0 %v55
  %192 = vmatprep.subr.mxu0 0.0
  %193 = vmatpush1.msra.mxu0 %v56
  %194 = vmatprep.subr.mxu0 0.0
  %195 = vmatpush1.msra.mxu0 %v57
  %196 = vmatprep.subr.mxu0 0.0
  %197 = vmatpush1.msra.mxu0 0.0
  %198 = vmatprep.subr.mxu0 0.0
  %199 = vmatpush1.msra.mxu0 0.0
  %200 = vmatprep.subr.mxu0 0.0
  %201 = vmatpush1.msra.mxu0 0.0
  %202 = vmatprep.subr.mxu0 0.0
  %203 = vmatpush1.msra.mxu0 0.0
  %204 = vmatprep.subr.mxu0 0.0
  %205 = vmatpush1.msra.mxu0 0.0
  %206 = vmatprep.subr.mxu0 0.0
  %207 = vmatpush1.msra.mxu0 0.0
  %208 = vmatprep.subr.mxu0 0.0
  %209 = vmatpush1.msra.mxu0 0.0
  %210 = vmatprep.subr.mxu0 0.0
  %211 = vmatpush1.msra.mxu0 0.0
  %212 = vmatprep.subr.mxu0 0.0
  %213 = vmatpush1.msra.mxu0 0.0
  %214 = vmatprep.subr.mxu0 0.0
  %215 = vmatpush1.msra.mxu0 0.0
  %216 = vmatprep.subr.mxu0 0.0
  %217 = vmatpush1.msra.mxu0 0.0
  %218 = vmatprep.subr.mxu0 0.0
  %219 = vmatpush1.msra.mxu0 0.0
  %220 = vmatprep.subr.mxu0 0.0
  %221 = vmatpush1.msra.mxu0 0.0
  %222 = vmatprep.subr.mxu0 0.0
  %223 = vmatpush1.msra.mxu0 0.0
  %224 = vmatprep.subr.mxu0 0.0
  %225 = vmatpush1.msra.mxu0 0.0
  %226 = vmatprep.subr.mxu0 0.0
  %227 = vmatpush1.msra.mxu0 0.0
  %228 = vmatprep.subr.mxu0 0.0
  %229 = vmatpush1.msra.mxu0 0.0
  %230 = vmatprep.subr.mxu0 0.0
  %231 = vmatpush1.msra.mxu0 0.0
  %232 = vmatprep.subr.mxu0 0.0
  %233 = vmatpush1.msra.mxu0 0.0
  %234 = vmatprep.subr.mxu0 0.0
  %235 = vmatpush1.msra.mxu0 0.0
  %236 = vmatprep.subr.mxu0 0.0
  %237 = vmatpush1.msra.mxu0 0.0
  %238 = vmatprep.subr.mxu0 0.0
  %239 = vmatpush1.msra.mxu0 0.0
  %240 = vmatprep.subr.mxu0 0.0
  %241 = vmatpush1.msra.mxu0 0.0
  %242 = vmatprep.subr.mxu0 0.0
  %243 = vmatpush1.msra.mxu0 0.0
  %244 = vmatprep.subr.mxu0 0.0
  %245 = vmatpush1.msra.mxu0 0.0
  %246 = vmatprep.subr.mxu0 0.0
  %247 = vmatpush1.msra.mxu0 0.0
  %248 = vmatprep.subr.mxu0 0.0
  %249 = vmatpush1.msra.mxu0 0.0
  %250 = vmatprep.subr.mxu0 0.0
  %251 = vmatpush1.msra.mxu0 0.0
  %252 = vmatprep.mubr.f32.mxu0 0.0
  %253 = vmatmul.mubr.f32.gmra.mrb[0].mxu0 %v174
  %v254 = vpop.f32.mrb[0].mxu0
  %v255 = vadd.f32 %v149, %v254
  %v256 = vpop.f32.mrb[0].mxu0
  %257 = vmatprep.mubr.f32.mxu0 0.0
  %258 = vmatmul.mubr.f32.gmra.mrb[0].mxu0 %v177
  %v259 = vpop.f32.mrb[0].mxu0
  %v260 = vadd.f32 %v154, %v259
  %v261 = vpop.f32.mrb[0].mxu0
  %262 = vmatprep.mubr.f32.mxu0 0.0
  %263 = vmatmul.mubr.f32.gmra.mrb[0].mxu0 %v180
  %v264 = vpop.f32.mrb[0].mxu0
  %v265 = vadd.f32 %v159, %v264
  %v266 = vpop.f32.mrb[0].mxu0
  %267 = vmatprep.mubr.f32.mxu0 0.0
  %268 = vmatmul.mubr.f32.gmra.mrb[0].mxu0 %v183
  %v269 = vpop.f32.mrb[0].mxu0
  %v270 = vadd.f32 %v164, %v269
  %v271 = vpop.f32.mrb[0].mxu0
  %272 = vmatprep.mubr.f32.mxu0 0.0
  %273 = vmatmul.mubr.f32.gmra.mrb[0].mxu0 %v186
  %v274 = vpop.f32.mrb[0].mxu0
  %v275 = vadd.f32 %v169, %v274
  %v276 = vpop.f32.mrb[0].mxu0
  %277 = vdwg.mxu0
  %v278 = vld [vmem:[%s4] sm:$0x1]
  %v280 = vlaneseq
  %v281 = vshrl.u32 %v280, 7
  %v282 = vsub.s32 0, %v281
  %v283 = vrot.slane %v278, %v282
  %v285 = vadd.f32 %v255, %v283
  %v286 = vadd.f32 %v260, %v283
  %v287 = vadd.f32 %v265, %v283
  %v288 = vadd.f32 %v270, %v283
  %v289 = vadd.f32 %v275, %v283
  %v290 = vxor.u32 %v285, 2147483648
  %v291 = vxor.u32 %v286, 2147483648
  %v292 = vxor.u32 %v287, 2147483648
  %v293 = vxor.u32 %v288, 2147483648
  %v294 = vxor.u32 %v289, 2147483648
  %v295 = vmul.f32 %v290, 1.442695
  %v296 = vpow.pop %v295
  %v297 = vmul.f32 %v291, 1.442695
  %v298 = vpow.pop %v297
  %v299 = vmul.f32 %v292, 1.442695
  %v300 = vpow.pop %v299
  %v301 = vmul.f32 %v293, 1.442695
  %v302 = vpow.pop %v301
  %v303 = vmul.f32 %v294, 1.442695
  %v304 = vpow.pop %v303
  %v305 = vadd.f32 %v296, 1.0
  %v306 = vadd.f32 %v298, 1.0
  %v307 = vadd.f32 %v300, 1.0
  %v308 = vadd.f32 %v302, 1.0
  %v309 = vadd.f32 %v304, 1.0
  %v310 = vrcp.pop %v305
  %v311 = vmul.f32 1.0, %v310
  %v312 = vrcp.pop %v306
  %v313 = vmul.f32 1.0, %v312
  %v314 = vrcp.pop %v307
  %v315 = vmul.f32 1.0, %v314
  %v316 = vrcp.pop %v308
  %v317 = vmul.f32 1.0, %v316
  %v318 = vrcp.pop %v309
  %v319 = vmul.f32 1.0, %v318
  %v320 = vmul.f32 %v285, %v311
  %v321 = vmul.f32 %v286, %v313
  %v322 = vmul.f32 %v287, %v315
  %v323 = vmul.f32 %v288, %v317
  %v324 = vmul.f32 %v289, %v319
  %v325 = vld [vmem:[%s5] sm:$0xff]
  %v326 = vld [vmem:[%s5 + $0x8] sm:$0xff]
  %v327 = vld [vmem:[%s5 + $0x10] sm:$0xff]
  %v328 = vld [vmem:[%s5 + $0x18] sm:$0xff]
  %v329 = vld [vmem:[%s6] sm:$0x1]
  %v331 = vlaneseq
  %v332 = vshrl.u32 %v331, 7
  %v333 = vsub.s32 0, %v332
  %v334 = vrot.slane %v329, %v333
  %v337 = vsel %vm172, %v320, 0
  %v340 = vsel %vm172, %v321, 0
  %v343 = vsel %vm172, %v322, 0
  %v346 = vsel %vm172, %v323, 0
  %v349 = vsel %vm172, %v324, 0
  %351 = vmatprep.subr.mxu0 0.0
  %352 = vmatpush1.msra.mxu0 %v325
  %353 = vmatprep.subr.mxu0 0.0
  %354 = vmatpush1.msra.mxu0 %v326
  %355 = vmatprep.subr.mxu0 0.0
  %356 = vmatpush1.msra.mxu0 %v327
  %357 = vmatprep.subr.mxu0 0.0
  %358 = vmatpush1.msra.mxu0 %v328
  %359 = vmatprep.subr.mxu0 0.0
  %360 = vmatpush1.msra.mxu0 0.0
  %361 = vmatprep.subr.mxu0 0.0
  %362 = vmatpush1.msra.mxu0 0.0
  %363 = vmatprep.subr.mxu0 0.0
  %364 = vmatpush1.msra.mxu0 0.0
  %365 = vmatprep.subr.mxu0 0.0
  %366 = vmatpush1.msra.mxu0 0.0
  %367 = vmatprep.subr.mxu0 0.0
  %368 = vmatpush1.msra.mxu0 0.0
  %369 = vmatprep.subr.mxu0 0.0
  %370 = vmatpush1.msra.mxu0 0.0
  %371 = vmatprep.subr.mxu0 0.0
  %372 = vmatpush1.msra.mxu0 0.0
  %373 = vmatprep.subr.mxu0 0.0
  %374 = vmatpush1.msra.mxu0 0.0
  %375 = vmatprep.subr.mxu0 0.0
  %376 = vmatpush1.msra.mxu0 0.0
  %377 = vmatprep.subr.mxu0 0.0
  %378 = vmatpush1.msra.mxu0 0.0
  %379 = vmatprep.subr.mxu0 0.0
  %380 = vmatpush1.msra.mxu0 0.0
  %381 = vmatprep.subr.mxu0 0.0
  %382 = vmatpush1.msra.mxu0 0.0
  %383 = vmatprep.subr.mxu0 0.0
  %384 = vmatpush1.msra.mxu0 0.0
  %385 = vmatprep.subr.mxu0 0.0
  %386 = vmatpush1.msra.mxu0 0.0
  %387 = vmatprep.subr.mxu0 0.0
  %388 = vmatpush1.msra.mxu0 0.0
  %389 = vmatprep.subr.mxu0 0.0
  %390 = vmatpush1.msra.mxu0 0.0
  %391 = vmatprep.subr.mxu0 0.0
  %392 = vmatpush1.msra.mxu0 0.0
  %393 = vmatprep.subr.mxu0 0.0
  %394 = vmatpush1.msra.mxu0 0.0
  %395 = vmatprep.subr.mxu0 0.0
  %396 = vmatpush1.msra.mxu0 0.0
  %397 = vmatprep.subr.mxu0 0.0
  %398 = vmatpush1.msra.mxu0 0.0
  %399 = vmatprep.subr.mxu0 0.0
  %400 = vmatpush1.msra.mxu0 0.0
  %401 = vmatprep.subr.mxu0 0.0
  %402 = vmatpush1.msra.mxu0 0.0
  %403 = vmatprep.subr.mxu0 0.0
  %404 = vmatpush1.msra.mxu0 0.0
  %405 = vmatprep.subr.mxu0 0.0
  %406 = vmatpush1.msra.mxu0 0.0
  %407 = vmatprep.subr.mxu0 0.0
  %408 = vmatpush1.msra.mxu0 0.0
  %409 = vmatprep.subr.mxu0 0.0
  %410 = vmatpush1.msra.mxu0 0.0
  %411 = vmatprep.subr.mxu0 0.0
  %412 = vmatpush1.msra.mxu0 0.0
  %413 = vmatprep.subr.mxu0 0.0
  %414 = vmatpush1.msra.mxu0 0.0
  %415 = vmatprep.mubr.f32.mxu0 0.0
  %416 = vmatmul.mubr.f32.gmra.mrb[0].mxu0 %v337
  %v417 = vpop.f32.mrb[0].mxu0
  %v418 = vadd.f32 %v334, %v417
  %v419 = vpop.f32.mrb[0].mxu0
  %420 = vmatprep.mubr.f32.mxu0 0.0
  %421 = vmatmul.mubr.f32.gmra.mrb[0].mxu0 %v340
  %v422 = vpop.f32.mrb[0].mxu0
  %v423 = vadd.f32 %v334, %v422
  %v424 = vpop.f32.mrb[0].mxu0
  %425 = vmatprep.mubr.f32.mxu0 0.0
  %426 = vmatmul.mubr.f32.gmra.mrb[0].mxu0 %v343
  %v427 = vpop.f32.mrb[0].mxu0
  %v428 = vadd.f32 %v334, %v427
  %v429 = vpop.f32.mrb[0].mxu0
  %430 = vmatprep.mubr.f32.mxu0 0.0
  %431 = vmatmul.mubr.f32.gmra.mrb[0].mxu0 %v346
  %v432 = vpop.f32.mrb[0].mxu0
  %v433 = vadd.f32 %v334, %v432
  %v434 = vpop.f32.mrb[0].mxu0
  %435 = vmatprep.mubr.f32.mxu0 0.0
  %436 = vmatmul.mubr.f32.gmra.mrb[0].mxu0 %v349
  %v437 = vpop.f32.mrb[0].mxu0
  %v438 = vadd.f32 %v334, %v437
  %v439 = vpop.f32.mrb[0].mxu0
  %440 = vdwg.mxu0
  %v441 = vld [vmem:[%s7] sm:$0x1]
  %v442 = vld [vmem:[%s8] sm:$0x1]
  %v443 = vsel %vm172, %v418, 0.0
  %444 = vadd.xlane.f32.xlu0 %v443
  %v445 = vpop.xlane.xlu0 %444
  %v446 = vsel %vm172, %v423, 0.0
  %447 = vadd.xlane.f32.xlu0 %v446
  %v448 = vpop.xlane.xlu0 %447
  %v449 = vsel %vm172, %v428, 0.0
  %450 = vadd.xlane.f32.xlu0 %v449
  %v451 = vpop.xlane.xlu0 %450
  %v452 = vsel %vm172, %v433, 0.0
  %453 = vadd.xlane.f32.xlu0 %v452
  %v454 = vpop.xlane.xlu0 %453
  %v455 = vsel %vm172, %v438, 0.0
  %456 = vadd.xlane.f32.xlu0 %v455
  %v457 = vpop.xlane.xlu0 %456
  %v458 = vrcp.pop 32.0
  %v459 = vmul.f32 %v445, %v458
  %v460 = vmul.f32 %v448, %v458
  %v461 = vmul.f32 %v451, %v458
  %v462 = vmul.f32 %v454, %v458
  %v463 = vmul.f32 %v457, %v458
  %v464 = vsub.f32 %v418, %v459
  %v465 = vsub.f32 %v423, %v460
  %v466 = vsub.f32 %v428, %v461
  %v467 = vsub.f32 %v433, %v462
  %v468 = vsub.f32 %v438, %v463
  %v469 = vmul.f32 %v464, %v464
  %v470 = vmul.f32 %v465, %v465
  %v471 = vmul.f32 %v466, %v466
  %v472 = vmul.f32 %v467, %v467
  %v473 = vmul.f32 %v468, %v468
  %v474 = vsel %vm172, %v469, 0.0
  %475 = vadd.xlane.f32.xlu0 %v474
  %v476 = vpop.xlane.xlu0 %475
  %v477 = vsel %vm172, %v470, 0.0
  %478 = vadd.xlane.f32.xlu0 %v477
  %v479 = vpop.xlane.xlu0 %478
  %v480 = vsel %vm172, %v471, 0.0
  %481 = vadd.xlane.f32.xlu0 %v480
  %v482 = vpop.xlane.xlu0 %481
  %v483 = vsel %vm172, %v472, 0.0
  %484 = vadd.xlane.f32.xlu0 %v483
  %v485 = vpop.xlane.xlu0 %484
  %v486 = vsel %vm172, %v473, 0.0
  %487 = vadd.xlane.f32.xlu0 %v486
  %v488 = vpop.xlane.xlu0 %487
  %v489 = vmul.f32 %v476, %v458
  %v490 = vmul.f32 %v479, %v458
  %v491 = vmul.f32 %v482, %v458
  %v492 = vmul.f32 %v485, %v458
  %v493 = vmul.f32 %v488, %v458
  %v494 = vadd.f32 %v489, 1e-05
  %v495 = vadd.f32 %v490, 1e-05
  %v496 = vadd.f32 %v491, 1e-05
  %v497 = vadd.f32 %v492, 1e-05
  %v498 = vadd.f32 %v493, 1e-05
  %v499 = vrsqrt.pop %v494
  %v500 = vrsqrt.pop %v495
  %v501 = vrsqrt.pop %v496
  %v502 = vrsqrt.pop %v497
  %v503 = vrsqrt.pop %v498
  %v504 = vmul.f32 %v464, %v499
  %v505 = vmul.f32 %v465, %v500
  %v506 = vmul.f32 %v466, %v501
  %v507 = vmul.f32 %v467, %v502
  %v508 = vmul.f32 %v468, %v503
  %v510 = vlaneseq
  %v511 = vshrl.u32 %v510, 7
  %v512 = vsub.s32 0, %v511
  %v513 = vrot.slane %v441, %v512
  %v515 = vmul.f32 %v504, %v513
  %v516 = vmul.f32 %v505, %v513
  %v517 = vmul.f32 %v506, %v513
  %v518 = vmul.f32 %v507, %v513
  %v519 = vmul.f32 %v508, %v513
  %v521 = vlaneseq
  %v522 = vshrl.u32 %v521, 7
  %v523 = vsub.s32 0, %v522
  %v524 = vrot.slane %v442, %v523
  %v526 = vadd.f32 %v515, %v524
  %v527 = vadd.f32 %v516, %v524
  %v528 = vadd.f32 %v517, %v524
  %v529 = vadd.f32 %v518, %v524
  %v530 = vadd.f32 %v519, %v524
  %v531 = vpack.c.bf16 %v527, %v526
  %v532 = vpack.c.bf16 %v529, %v528
  %v533 = vpack.c.bf16 %v530, %v530
  %v537 = vunpack.c.l.b16 %v531
  %v538 = vunpack.c.h.b16 %v531
  %v539 = vunpack.c.l.b16 %v532
  %v540 = vunpack.c.h.b16 %v532
  %v541 = vunpack.c.l.b16 %v533
  %v542 = vpack.c.b16 %v537, %v537
  %v543 = vpack.c.b16 %v538, %v538
  %v544 = vpack.c.b16 %v539, %v539
  %v545 = vpack.c.b16 %v540, %v540
  %v546 = vpack.c.b16 %v541, %v541
  %vm552 = vcmask 257024
  %553 = vst.msk [vmem:[%s9] sm:$0xf] %vm552, %v542
  %554 = vst.msk [vmem:[%s9 + $0x4] sm:$0xf] %vm552, %v543
  %555 = vst.msk [vmem:[%s9 + $0x8] sm:$0xf] %vm552, %v544
  %556 = vst.msk [vmem:[%s9 + $0xc] sm:$0xf] %vm552, %v545
  %557 = vst.msk [vmem:[%s9 + $0x10] sm:$0xf] %vm552, %v546
  %v558 = vadd.f32 %v39, %v526
  %v559 = vadd.f32 %v40, %v527
  %v560 = vadd.f32 %v41, %v528
  %v561 = vadd.f32 %v42, %v529
  %v562 = vadd.f32 %v43, %v530
  %v563 = vpack.c.bf16 %v559, %v558
  %v564 = vpack.c.bf16 %v561, %v560
  %v565 = vpack.c.bf16 %v562, %v562
  %v569 = vunpack.c.l.b16 %v563
  %v570 = vunpack.c.h.b16 %v563
  %v571 = vunpack.c.l.b16 %v564
  %v572 = vunpack.c.h.b16 %v564
  %v573 = vunpack.c.l.b16 %v565
  %v574 = vpack.c.b16 %v569, %v569
  %v575 = vpack.c.b16 %v570, %v570
  %v576 = vpack.c.b16 %v571, %v571
  %v577 = vpack.c.b16 %v572, %v572
  %v578 = vpack.c.b16 %v573, %v573
  %584 = vst.msk [vmem:[%s10] sm:$0xf] %vm552, %v574
  %585 = vst.msk [vmem:[%s10 + $0x4] sm:$0xf] %vm552, %v575
  %586 = vst.msk [vmem:[%s10 + $0x8] sm:$0xf] %vm552, %v576
  %587 = vst.msk [vmem:[%s10 + $0xc] sm:$0xf] %vm552, %v577
  %588 = vst.msk [vmem:[%s10 + $0x10] sm:$0xf] %vm552, %v578
  // Predicated region
  $region38: #{processor_forward.11} parent=0 // pred_check
    _
  $region39: #{processor_forward.11} parent=0 // pred_check_branch
    %590 = sbr.rel (0) target = $region41
  $region40: #{processor_forward.11} parent=0 // pred_region
    _
  $region41: #{processor_forward.11} parent=0 // pred_fallthru
    _
  // Predicated region
  $region42: #{processor_forward.11} parent=0 // pred_check
    _
  $region43: #{processor_forward.11} parent=0 // pred_check_branch
    %592 = sbr.rel (0) target = $region45
  $region44: #{processor_forward.11} parent=0 // pred_region
    _
  $region45: #{processor_forward.11} parent=0 // pred_fallthru
    _
  // Predicated region
  $region46: #{processor_forward.11} parent=0 // pred_check
    _
  $region47: #{processor_forward.11} parent=0 // pred_check_branch
    %594 = sbr.rel (0) target = $region49
  $region48: #{processor_forward.11} parent=0 // pred_region
    _
  $region49: #{processor_forward.11} parent=0 // pred_fallthru
    _
  // Predicated region
  $region50: #{processor_forward.11} parent=0 // pred_check
    _
  $region51: #{processor_forward.11} parent=0 // pred_check_branch
    %596 = sbr.rel (0) target = $region53
  $region52: #{processor_forward.11} parent=0 // pred_region
    _
  $region53: #{processor_forward.11} parent=0 // pred_fallthru
    _

// kernel: processor_forward.12
$region0: #{processor_forward.12}
  #allocation0 [shape = 'u32[]', space=smem, size = 0x4, offset = 0x4, fixed_abs, tag = 'smem constant byte address 0x4 - core index']
  #allocation1 [shape = 'u32[144,128]{1,0:T(1,128)}', space=vmem, size = 0x12000, scoped, tag = 'internal scratch']
  %s0 = inlined_call_operand.vmem [shape: bf16[16,32], index: 0, kind: input, shape index: {}, may-alias: {0,10}]
  %s1 = inlined_call_operand.vmem [shape: f32[16,32], index: 1, kind: input, shape index: {}]
  %s2 = inlined_call_operand.vmem [shape: f32[16,1], index: 2, kind: input, shape index: {}]
  %s3 = inlined_call_operand.vmem [shape: f32[32,32], index: 3, kind: input, shape index: {}]
  %s4 = inlined_call_operand.vmem [shape: f32[32,32], index: 4, kind: input, shape index: {}]
  %s5 = inlined_call_operand.vmem [shape: f32[1,32], index: 5, kind: input, shape index: {}]
  %s6 = inlined_call_operand.vmem [shape: f32[32,32], index: 6, kind: input, shape index: {}]
  %s7 = inlined_call_operand.vmem [shape: f32[1,32], index: 7, kind: input, shape index: {}]
  %s8 = inlined_call_operand.vmem [shape: f32[1,32], index: 8, kind: input, shape index: {}]
  %s9 = inlined_call_operand.vmem [shape: f32[1,32], index: 9, kind: input, shape index: {}]
  %s10 = inlined_call_operand.vmem [shape: bf16[16,32], index: 10, kind: output, shape index: {}, may-alias: {0,10}]
  %s11 = sld [smem:[#allocation0]]
  $region50: #{processor_forward.12} parent=0
    _
  %s13 = ssub.s32 1, %s11
  %s14 = scalar_select 0, %s13, %s11
  // Predicated region
  $region2: #{processor_forward.12} parent=0 // pred_check
    _
  $region3: #{processor_forward.12} parent=0 // pred_check_branch
    %16 = sbr.rel (0) target = $region5
  $region4: #{processor_forward.12} parent=0 // pred_region
    _
  $region5: #{processor_forward.12} parent=0 // pred_fallthru
    _
  // Predicated region
  $region6: #{processor_forward.12} parent=0 // pred_check
    _
  $region7: #{processor_forward.12} parent=0 // pred_check_branch
    %18 = sbr.rel (0) target = $region9
  $region8: #{processor_forward.12} parent=0 // pred_region
    _
  $region9: #{processor_forward.12} parent=0 // pred_fallthru
    _
  // Predicated region
  $region10: #{processor_forward.12} parent=0 // pred_check
    _
  $region11: #{processor_forward.12} parent=0 // pred_check_branch
    %20 = sbr.rel (0) target = $region13
  $region12: #{processor_forward.12} parent=0 // pred_region
    _
  $region13: #{processor_forward.12} parent=0 // pred_fallthru
    _
  // Predicated region
  $region14: #{processor_forward.12} parent=0 // pred_check
    _
  $region15: #{processor_forward.12} parent=0 // pred_check_branch
    %22 = sbr.rel (0) target = $region17
  $region16: #{processor_forward.12} parent=0 // pred_region
    _
  $region17: #{processor_forward.12} parent=0 // pred_fallthru
    _
  // Predicated region
  $region18: #{processor_forward.12} parent=0 // pred_check
    _
  $region19: #{processor_forward.12} parent=0 // pred_check_branch
    %24 = sbr.rel (0) target = $region21
  $region20: #{processor_forward.12} parent=0 // pred_region
    _
  $region21: #{processor_forward.12} parent=0 // pred_fallthru
    _
  // Predicated region
  $region22: #{processor_forward.12} parent=0 // pred_check
    _
  $region23: #{processor_forward.12} parent=0 // pred_check_branch
    %26 = sbr.rel (0) target = $region25
  $region24: #{processor_forward.12} parent=0 // pred_region
    _
  $region25: #{processor_forward.12} parent=0 // pred_fallthru
    _
  // Predicated region
  $region26: #{processor_forward.12} parent=0 // pred_check
    _
  $region27: #{processor_forward.12} parent=0 // pred_check_branch
    %28 = sbr.rel (0) target = $region29
  $region28: #{processor_forward.12} parent=0 // pred_region
    _
  $region29: #{processor_forward.12} parent=0 // pred_fallthru
    _
  // Predicated region
  $region30: #{processor_forward.12} parent=0 // pred_check
    _
  $region31: #{processor_forward.12} parent=0 // pred_check_branch
    %30 = sbr.rel (0) target = $region33
  $region32: #{processor_forward.12} parent=0 // pred_region
    _
  $region33: #{processor_forward.12} parent=0 // pred_fallthru
    _
  // Predicated region
  $region34: #{processor_forward.12} parent=0 // pred_check
    _
  $region35: #{processor_forward.12} parent=0 // pred_check_branch
    %32 = sbr.rel (0) target = $region37
  $region36: #{processor_forward.12} parent=0 // pred_region
    _
  $region37: #{processor_forward.12} parent=0 // pred_fallthru
    _
  // Predicated region
  $region38: #{processor_forward.12} parent=0 // pred_check
    _
  $region39: #{processor_forward.12} parent=0 // pred_check_branch
    %34 = sbr.rel (0) target = $region41
  $region40: #{processor_forward.12} parent=0 // pred_region
    _
  $region41: #{processor_forward.12} parent=0 // pred_fallthru
    _
  %v35 = vld [vmem:[%s0] sm:$0xf]
  %v36 = vld [vmem:[%s0 + $0x4] sm:$0xf]
  %v37 = vunpack.c.l.bf16 %v35
  %v38 = vunpack.c.l.bf16 %v36
  %v39 = vld [vmem:[%s1] sm:$0xff]
  %v40 = vld [vmem:[%s1 + $0x8] sm:$0xff]
  %v41 = vld [vmem:[%s2] sm:$0xff]
  %v42 = vld [vmem:[%s2 + $0x8] sm:$0xff]
  %44 = vset.pattern.permute.xlu0 0
  %45 = vperm.xlu0 %44, %v41
  %v46 = vpop.permute.xlu0 %45
  %49 = vset.pattern.permute.xlu0 0
  %50 = vperm.xlu0 %49, %v42
  %v51 = vpop.permute.xlu0 %50
  %v53 = vmul.f32 %v39, %v46
  %v54 = vmul.f32 %v40, %v51
  %v55 = vld [vmem:[%s3] sm:$0xff]
  %v56 = vld [vmem:[%s3 + $0x8] sm:$0xff]
  %v57 = vld [vmem:[%s3 + $0x10] sm:$0xff]
  %v58 = vld [vmem:[%s3 + $0x18] sm:$0xff]
  %v59 = vld [vmem:[%s4] sm:$0xff]
  %v60 = vld [vmem:[%s4 + $0x8] sm:$0xff]
  %v61 = vld [vmem:[%s4 + $0x10] sm:$0xff]
  %v62 = vld [vmem:[%s4 + $0x18] sm:$0xff]
  %vm63 = vcmask 261120
  %v65 = vsel %vm63, %v53, 0
  %v68 = vsel %vm63, %v54, 0
  %70 = vmatprep.subr.mxu0 0.0
  %71 = vmatpush1.msra.mxu0 %v59
  %72 = vmatprep.subr.mxu0 0.0
  %73 = vmatpush1.msra.mxu0 %v60
  %74 = vmatprep.subr.mxu0 0.0
  %75 = vmatpush1.msra.mxu0 %v61
  %76 = vmatprep.subr.mxu0 0.0
  %77 = vmatpush1.msra.mxu0 %v62
  %78 = vmatprep.subr.mxu0 0.0
  %79 = vmatpush1.msra.mxu0 0.0
  %80 = vmatprep.subr.mxu0 0.0
  %81 = vmatpush1.msra.mxu0 0.0
  %82 = vmatprep.subr.mxu0 0.0
  %83 = vmatpush1.msra.mxu0 0.0
  %84 = vmatprep.subr.mxu0 0.0
  %85 = vmatpush1.msra.mxu0 0.0
  %86 = vmatprep.subr.mxu0 0.0
  %87 = vmatpush1.msra.mxu0 0.0
  %88 = vmatprep.subr.mxu0 0.0
  %89 = vmatpush1.msra.mxu0 0.0
  %90 = vmatprep.subr.mxu0 0.0
  %91 = vmatpush1.msra.mxu0 0.0
  %92 = vmatprep.subr.mxu0 0.0
  %93 = vmatpush1.msra.mxu0 0.0
  %94 = vmatprep.subr.mxu0 0.0
  %95 = vmatpush1.msra.mxu0 0.0
  %96 = vmatprep.subr.mxu0 0.0
  %97 = vmatpush1.msra.mxu0 0.0
  %98 = vmatprep.subr.mxu0 0.0
  %99 = vmatpush1.msra.mxu0 0.0
  %100 = vmatprep.subr.mxu0 0.0
  %101 = vmatpush1.msra.mxu0 0.0
  %102 = vmatprep.subr.mxu0 0.0
  %103 = vmatpush1.msra.mxu0 0.0
  %104 = vmatprep.subr.mxu0 0.0
  %105 = vmatpush1.msra.mxu0 0.0
  %106 = vmatprep.subr.mxu0 0.0
  %107 = vmatpush1.msra.mxu0 0.0
  %108 = vmatprep.subr.mxu0 0.0
  %109 = vmatpush1.msra.mxu0 0.0
  %110 = vmatprep.subr.mxu0 0.0
  %111 = vmatpush1.msra.mxu0 0.0
  %112 = vmatprep.subr.mxu0 0.0
  %113 = vmatpush1.msra.mxu0 0.0
  %114 = vmatprep.subr.mxu0 0.0
  %115 = vmatpush1.msra.mxu0 0.0
  %116 = vmatprep.subr.mxu0 0.0
  %117 = vmatpush1.msra.mxu0 0.0
  %118 = vmatprep.subr.mxu0 0.0
  %119 = vmatpush1.msra.mxu0 0.0
  %120 = vmatprep.subr.mxu0 0.0
  %121 = vmatpush1.msra.mxu0 0.0
  %122 = vmatprep.subr.mxu0 0.0
  %123 = vmatpush1.msra.mxu0 0.0
  %124 = vmatprep.subr.mxu0 0.0
  %125 = vmatpush1.msra.mxu0 0.0
  %126 = vmatprep.subr.mxu0 0.0
  %127 = vmatpush1.msra.mxu0 0.0
  %128 = vmatprep.subr.mxu0 0.0
  %129 = vmatpush1.msra.mxu0 0.0
  %130 = vmatprep.subr.mxu0 0.0
  %131 = vmatpush1.msra.mxu0 0.0
  %132 = vmatprep.subr.mxu0 0.0
  %133 = vmatpush1.msra.mxu0 0.0
  %134 = vmatprep.mubr.f32.mxu0 0.0
  %135 = vmatmul.mubr.f32.gmra.mrb[0].mxu0 %v65
  %v136 = vpop.f32.mrb[0].mxu0
  %v137 = vadd.f32 0.0, %v136
  %v138 = vpop.f32.mrb[0].mxu0
  %139 = vmatprep.mubr.f32.mxu0 0.0
  %140 = vmatmul.mubr.f32.gmra.mrb[0].mxu0 %v68
  %v141 = vpop.f32.mrb[0].mxu0
  %v142 = vadd.f32 0.0, %v141
  %v143 = vpop.f32.mrb[0].mxu0
  %144 = vdwg.mxu0
  %v146 = vsel %vm63, %v37, 0
  %v149 = vsel %vm63, %v38, 0
  %151 = vmatprep.subr.mxu0 0.0
  %152 = vmatpush1.msra.mxu0 %v55
  %153 = vmatprep.subr.mxu0 0.0
  %154 = vmatpush1.msra.mxu0 %v56
  %155 = vmatprep.subr.mxu0 0.0
  %156 = vmatpush1.msra.mxu0 %v57
  %157 = vmatprep.subr.mxu0 0.0
  %158 = vmatpush1.msra.mxu0 %v58
  %159 = vmatprep.subr.mxu0 0.0
  %160 = vmatpush1.msra.mxu0 0.0
  %161 = vmatprep.subr.mxu0 0.0
  %162 = vmatpush1.msra.mxu0 0.0
  %163 = vmatprep.subr.mxu0 0.0
  %164 = vmatpush1.msra.mxu0 0.0
  %165 = vmatprep.subr.mxu0 0.0
  %166 = vmatpush1.msra.mxu0 0.0
  %167 = vmatprep.subr.mxu0 0.0
  %168 = vmatpush1.msra.mxu0 0.0
  %169 = vmatprep.subr.mxu0 0.0
  %170 = vmatpush1.msra.mxu0 0.0
  %171 = vmatprep.subr.mxu0 0.0
  %172 = vmatpush1.msra.mxu0 0.0
  %173 = vmatprep.subr.mxu0 0.0
  %174 = vmatpush1.msra.mxu0 0.0
  %175 = vmatprep.subr.mxu0 0.0
  %176 = vmatpush1.msra.mxu0 0.0
  %177 = vmatprep.subr.mxu0 0.0
  %178 = vmatpush1.msra.mxu0 0.0
  %179 = vmatprep.subr.mxu0 0.0
  %180 = vmatpush1.msra.mxu0 0.0
  %181 = vmatprep.subr.mxu0 0.0
  %182 = vmatpush1.msra.mxu0 0.0
  %183 = vmatprep.subr.mxu0 0.0
  %184 = vmatpush1.msra.mxu0 0.0
  %185 = vmatprep.subr.mxu0 0.0
  %186 = vmatpush1.msra.mxu0 0.0
  %187 = vmatprep.subr.mxu0 0.0
  %188 = vmatpush1.msra.mxu0 0.0
  %189 = vmatprep.subr.mxu0 0.0
  %190 = vmatpush1.msra.mxu0 0.0
  %191 = vmatprep.subr.mxu0 0.0
  %192 = vmatpush1.msra.mxu0 0.0
  %193 = vmatprep.subr.mxu0 0.0
  %194 = vmatpush1.msra.mxu0 0.0
  %195 = vmatprep.subr.mxu0 0.0
  %196 = vmatpush1.msra.mxu0 0.0
  %197 = vmatprep.subr.mxu0 0.0
  %198 = vmatpush1.msra.mxu0 0.0
  %199 = vmatprep.subr.mxu0 0.0
  %200 = vmatpush1.msra.mxu0 0.0
  %201 = vmatprep.subr.mxu0 0.0
  %202 = vmatpush1.msra.mxu0 0.0
  %203 = vmatprep.subr.mxu0 0.0
  %204 = vmatpush1.msra.mxu0 0.0
  %205 = vmatprep.subr.mxu0 0.0
  %206 = vmatpush1.msra.mxu0 0.0
  %207 = vmatprep.subr.mxu0 0.0
  %208 = vmatpush1.msra.mxu0 0.0
  %209 = vmatprep.subr.mxu0 0.0
  %210 = vmatpush1.msra.mxu0 0.0
  %211 = vmatprep.subr.mxu0 0.0
  %212 = vmatpush1.msra.mxu0 0.0
  %213 = vmatprep.subr.mxu0 0.0
  %214 = vmatpush1.msra.mxu0 0.0
  %215 = vmatprep.mubr.f32.mxu0 0.0
  %216 = vmatmul.mubr.f32.gmra.mrb[0].mxu0 %v146
  %v217 = vpop.f32.mrb[0].mxu0
  %v218 = vadd.f32 %v137, %v217
  %v219 = vpop.f32.mrb[0].mxu0
  %220 = vmatprep.mubr.f32.mxu0 0.0
  %221 = vmatmul.mubr.f32.gmra.mrb[0].mxu0 %v149
  %v222 = vpop.f32.mrb[0].mxu0
  %v223 = vadd.f32 %v142, %v222
  %v224 = vpop.f32.mrb[0].mxu0
  %225 = vdwg.mxu0
  %v226 = vld [vmem:[%s5] sm:$0x1]
  %v228 = vlaneseq
  %v229 = vshrl.u32 %v228, 7
  %v230 = vsub.s32 0, %v229
  %v231 = vrot.slane %v226, %v230
  %v233 = vadd.f32 %v218, %v231
  %v234 = vadd.f32 %v223, %v231
  %v235 = vxor.u32 %v233, 2147483648
  %v236 = vxor.u32 %v234, 2147483648
  %v237 = vmul.f32 %v235, 1.442695
  %v238 = vpow.pop %v237
  %v239 = vmul.f32 %v236, 1.442695
  %v240 = vpow.pop %v239
  %v241 = vadd.f32 %v238, 1.0
  %v242 = vadd.f32 %v240, 1.0
  %v243 = vrcp.pop %v241
  %v244 = vmul.f32 1.0, %v243
  %v245 = vrcp.pop %v242
  %v246 = vmul.f32 1.0, %v245
  %v247 = vmul.f32 %v233, %v244
  %v248 = vmul.f32 %v234, %v246
  %v249 = vld [vmem:[%s6] sm:$0xff]
  %v250 = vld [vmem:[%s6 + $0x8] sm:$0xff]
  %v251 = vld [vmem:[%s6 + $0x10] sm:$0xff]
  %v252 = vld [vmem:[%s6 + $0x18] sm:$0xff]
  %v253 = vld [vmem:[%s7] sm:$0x1]
  %v255 = vlaneseq
  %v256 = vshrl.u32 %v255, 7
  %v257 = vsub.s32 0, %v256
  %v258 = vrot.slane %v253, %v257
  %v261 = vsel %vm63, %v247, 0
  %v264 = vsel %vm63, %v248, 0
  %266 = vmatprep.subr.mxu0 0.0
  %267 = vmatpush1.msra.mxu0 %v249
  %268 = vmatprep.subr.mxu0 0.0
  %269 = vmatpush1.msra.mxu0 %v250
  %270 = vmatprep.subr.mxu0 0.0
  %271 = vmatpush1.msra.mxu0 %v251
  %272 = vmatprep.subr.mxu0 0.0
  %273 = vmatpush1.msra.mxu0 %v252
  %274 = vmatprep.subr.mxu0 0.0
  %275 = vmatpush1.msra.mxu0 0.0
  %276 = vmatprep.subr.mxu0 0.0
  %277 = vmatpush1.msra.mxu0 0.0
  %278 = vmatprep.subr.mxu0 0.0
  %279 = vmatpush1.msra.mxu0 0.0
  %280 = vmatprep.subr.mxu0 0.0
  %281 = vmatpush1.msra.mxu0 0.0
  %282 = vmatprep.subr.mxu0 0.0
  %283 = vmatpush1.msra.mxu0 0.0
  %284 = vmatprep.subr.mxu0 0.0
  %285 = vmatpush1.msra.mxu0 0.0
  %286 = vmatprep.subr.mxu0 0.0
  %287 = vmatpush1.msra.mxu0 0.0
  %288 = vmatprep.subr.mxu0 0.0
  %289 = vmatpush1.msra.mxu0 0.0
  %290 = vmatprep.subr.mxu0 0.0
  %291 = vmatpush1.msra.mxu0 0.0
  %292 = vmatprep.subr.mxu0 0.0
  %293 = vmatpush1.msra.mxu0 0.0
  %294 = vmatprep.subr.mxu0 0.0
  %295 = vmatpush1.msra.mxu0 0.0
  %296 = vmatprep.subr.mxu0 0.0
  %297 = vmatpush1.msra.mxu0 0.0
  %298 = vmatprep.subr.mxu0 0.0
  %299 = vmatpush1.msra.mxu0 0.0
  %300 = vmatprep.subr.mxu0 0.0
  %301 = vmatpush1.msra.mxu0 0.0
  %302 = vmatprep.subr.mxu0 0.0
  %303 = vmatpush1.msra.mxu0 0.0
  %304 = vmatprep.subr.mxu0 0.0
  %305 = vmatpush1.msra.mxu0 0.0
  %306 = vmatprep.subr.mxu0 0.0
  %307 = vmatpush1.msra.mxu0 0.0
  %308 = vmatprep.subr.mxu0 0.0
  %309 = vmatpush1.msra.mxu0 0.0
  %310 = vmatprep.subr.mxu0 0.0
  %311 = vmatpush1.msra.mxu0 0.0
  %312 = vmatprep.subr.mxu0 0.0
  %313 = vmatpush1.msra.mxu0 0.0
  %314 = vmatprep.subr.mxu0 0.0
  %315 = vmatpush1.msra.mxu0 0.0
  %316 = vmatprep.subr.mxu0 0.0
  %317 = vmatpush1.msra.mxu0 0.0
  %318 = vmatprep.subr.mxu0 0.0
  %319 = vmatpush1.msra.mxu0 0.0
  %320 = vmatprep.subr.mxu0 0.0
  %321 = vmatpush1.msra.mxu0 0.0
  %322 = vmatprep.subr.mxu0 0.0
  %323 = vmatpush1.msra.mxu0 0.0
  %324 = vmatprep.subr.mxu0 0.0
  %325 = vmatpush1.msra.mxu0 0.0
  %326 = vmatprep.subr.mxu0 0.0
  %327 = vmatpush1.msra.mxu0 0.0
  %328 = vmatprep.subr.mxu0 0.0
  %329 = vmatpush1.msra.mxu0 0.0
  %330 = vmatprep.mubr.f32.mxu0 0.0
  %331 = vmatmul.mubr.f32.gmra.mrb[0].mxu0 %v261
  %v332 = vpop.f32.mrb[0].mxu0
  %v333 = vadd.f32 %v258, %v332
  %v334 = vpop.f32.mrb[0].mxu0
  %335 = vmatprep.mubr.f32.mxu0 0.0
  %336 = vmatmul.mubr.f32.gmra.mrb[0].mxu0 %v264
  %v337 = vpop.f32.mrb[0].mxu0
  %v338 = vadd.f32 %v258, %v337
  %v339 = vpop.f32.mrb[0].mxu0
  %340 = vdwg.mxu0
  %v341 = vld [vmem:[%s8] sm:$0x1]
  %v342 = vld [vmem:[%s9] sm:$0x1]
  %v343 = vsel %vm63, %v333, 0.0
  %344 = vadd.xlane.f32.xlu0 %v343
  %v345 = vpop.xlane.xlu0 %344
  %v346 = vsel %vm63, %v338, 0.0
  %347 = vadd.xlane.f32.xlu0 %v346
  %v348 = vpop.xlane.xlu0 %347
  %v349 = vrcp.pop 32.0
  %v350 = vmul.f32 %v345, %v349
  %v351 = vmul.f32 %v348, %v349
  %v352 = vsub.f32 %v333, %v350
  %v353 = vsub.f32 %v338, %v351
  %v354 = vmul.f32 %v352, %v352
  %v355 = vmul.f32 %v353, %v353
  %v356 = vsel %vm63, %v354, 0.0
  %357 = vadd.xlane.f32.xlu0 %v356
  %v358 = vpop.xlane.xlu0 %357
  %v359 = vsel %vm63, %v355, 0.0
  %360 = vadd.xlane.f32.xlu0 %v359
  %v361 = vpop.xlane.xlu0 %360
  %v362 = vmul.f32 %v358, %v349
  %v363 = vmul.f32 %v361, %v349
  %v364 = vadd.f32 %v362, 1e-05
  %v365 = vadd.f32 %v363, 1e-05
  %v366 = vrsqrt.pop %v364
  %v367 = vrsqrt.pop %v365
  %v368 = vmul.f32 %v352, %v366
  %v369 = vmul.f32 %v353, %v367
  %v371 = vlaneseq
  %v372 = vshrl.u32 %v371, 7
  %v373 = vsub.s32 0, %v372
  %v374 = vrot.slane %v341, %v373
  %v376 = vmul.f32 %v368, %v374
  %v377 = vmul.f32 %v369, %v374
  %v379 = vlaneseq
  %v380 = vshrl.u32 %v379, 7
  %v381 = vsub.s32 0, %v380
  %v382 = vrot.slane %v342, %v381
  %v384 = vadd.f32 %v376, %v382
  %v385 = vadd.f32 %v377, %v382
  %v386 = vadd.f32 %v37, %v384
  %v387 = vadd.f32 %v38, %v385
  %v388 = vpack.c.bf16 %v387, %v386
  %v390 = vunpack.c.l.b16 %v388
  %v391 = vunpack.c.h.b16 %v388
  %v392 = vpack.c.b16 %v390, %v390
  %v393 = vpack.c.b16 %v391, %v391
  %vm396 = vcmask 257024
  %397 = vst.msk [vmem:[%s10] sm:$0xf] %vm396, %v392
  %398 = vst.msk [vmem:[%s10 + $0x4] sm:$0xf] %vm396, %v393
  // Predicated region
  $region42: #{processor_forward.12} parent=0 // pred_check
    _
  $region43: #{processor_forward.12} parent=0 // pred_check_branch
    %400 = sbr.rel (0) target = $region45
  $region44: #{processor_forward.12} parent=0 // pred_region
    _
  $region45: #{processor_forward.12} parent=0 // pred_fallthru
    _
  // Predicated region
  $region46: #{processor_forward.12} parent=0 // pred_check
    _
  $region47: #{processor_forward.12} parent=0 // pred_check_branch
    %402 = sbr.rel (0) target = $region49
  $region48: #{processor_forward.12} parent=0 // pred_region
    _
  $region49: #{processor_forward.12} parent=0 // pred_fallthru
    _

// kernel: processor_forward.19
$region0: #{processor_forward.19}
  #allocation0 [shape = 'u32[]', space=smem, size = 0x4, offset = 0x4, fixed_abs, tag = 'smem constant byte address 0x4 - core index']
  #allocation1 [shape = 'u32[144,128]{1,0:T(1,128)}', space=vmem, size = 0x12000, scoped, tag = 'internal scratch']
  %s0 = inlined_call_operand.vmem [shape: bf16[16,32], index: 0, kind: input, shape index: {}]
  %s1 = inlined_call_operand.vmem [shape: f32[32,32], index: 1, kind: input, shape index: {}]
  %s2 = inlined_call_operand.vmem [shape: f32[1,32], index: 2, kind: input, shape index: {}]
  %s3 = inlined_call_operand.vmem [shape: f32[32,32], index: 3, kind: input, shape index: {}]
  %s4 = inlined_call_operand.vmem [shape: f32[1,32], index: 4, kind: input, shape index: {}]
  %s5 = inlined_call_operand.hbm [shape: f32[16,32], index: 5, kind: output, shape index: {}]
  %s6 = sld [smem:[#allocation0]]
  $region30: #{processor_forward.19} parent=0
    _
  %s8 = ssub.s32 1, %s6
  %s9 = scalar_select 0, %s8, %s6
  $region1: #{processor_forward.19} parent=0
    #allocation2 [shape = 'u8[8192]{0}', space=vmem, size = 0x2000, scoped, tag = 'output window, operand 0, single buffered']
    #allocation3 [shape = 's32[1]{0}', space=sflag, size = 0x4, scoped, tag = 'scoped memory for processor_forward.19']
    %10 = vsyncpa [#allocation3], 0
    // Predicated region
    $region2: #{processor_forward.19} parent=1 // pred_check
      _
    $region3: #{processor_forward.19} parent=1 // pred_check_branch
      %12 = sbr.rel (0) target = $region5
    $region4: #{processor_forward.19} parent=1 // pred_region
      _
    $region5: #{processor_forward.19} parent=1 // pred_fallthru
      _
    // Predicated region
    $region6: #{processor_forward.19} parent=1 // pred_check
      _
    $region7: #{processor_forward.19} parent=1 // pred_check_branch
      %14 = sbr.rel (0) target = $region9
    $region8: #{processor_forward.19} parent=1 // pred_region
      _
    $region9: #{processor_forward.19} parent=1 // pred_fallthru
      _
    // Predicated region
    $region10: #{processor_forward.19} parent=1 // pred_check
      _
    $region11: #{processor_forward.19} parent=1 // pred_check_branch
      %16 = sbr.rel (0) target = $region13
    $region12: #{processor_forward.19} parent=1 // pred_region
      _
    $region13: #{processor_forward.19} parent=1 // pred_fallthru
      _
    // Predicated region
    $region14: #{processor_forward.19} parent=1 // pred_check
      _
    $region15: #{processor_forward.19} parent=1 // pred_check_branch
      %18 = sbr.rel (0) target = $region17
    $region16: #{processor_forward.19} parent=1 // pred_region
      _
    $region17: #{processor_forward.19} parent=1 // pred_fallthru
      _
    // Predicated region
    $region18: #{processor_forward.19} parent=1 // pred_check
      _
    $region19: #{processor_forward.19} parent=1 // pred_check_branch
      %20 = sbr.rel (0) target = $region21
    $region20: #{processor_forward.19} parent=1 // pred_region
      _
    $region21: #{processor_forward.19} parent=1 // pred_fallthru
      _
    %v21 = vld [vmem:[%s0] sm:$0xf]
    %v22 = vld [vmem:[%s0 + $0x4] sm:$0xf]
    %v23 = vunpack.c.l.bf16 %v21
    %v24 = vunpack.c.l.bf16 %v22
    %v25 = vld [vmem:[%s1] sm:$0xff]
    %v26 = vld [vmem:[%s1 + $0x8] sm:$0xff]
    %v27 = vld [vmem:[%s1 + $0x10] sm:$0xff]
    %v28 = vld [vmem:[%s1 + $0x18] sm:$0xff]
    %v29 = vld [vmem:[%s2] sm:$0x1]
    %v31 = vlaneseq
    %v32 = vshrl.u32 %v31, 7
    %v33 = vsub.s32 0, %v32
    %v34 = vrot.slane %v29, %v33
    %vm36 = vcmask 261120
    %v38 = vsel %vm36, %v23, 0
    %v41 = vsel %vm36, %v24, 0
    %43 = vmatprep.subr.mxu0 0.0
    %44 = vmatpush1.msra.mxu0 %v25
    %45 = vmatprep.subr.mxu0 0.0
    %46 = vmatpush1.msra.mxu0 %v26
    %47 = vmatprep.subr.mxu0 0.0
    %48 = vmatpush1.msra.mxu0 %v27
    %49 = vmatprep.subr.mxu0 0.0
    %50 = vmatpush1.msra.mxu0 %v28
    %51 = vmatprep.subr.mxu0 0.0
    %52 = vmatpush1.msra.mxu0 0.0
    %53 = vmatprep.subr.mxu0 0.0
    %54 = vmatpush1.msra.mxu0 0.0
    %55 = vmatprep.subr.mxu0 0.0
    %56 = vmatpush1.msra.mxu0 0.0
    %57 = vmatprep.subr.mxu0 0.0
    %58 = vmatpush1.msra.mxu0 0.0
    %59 = vmatprep.subr.mxu0 0.0
    %60 = vmatpush1.msra.mxu0 0.0
    %61 = vmatprep.subr.mxu0 0.0
    %62 = vmatpush1.msra.mxu0 0.0
    %63 = vmatprep.subr.mxu0 0.0
    %64 = vmatpush1.msra.mxu0 0.0
    %65 = vmatprep.subr.mxu0 0.0
    %66 = vmatpush1.msra.mxu0 0.0
    %67 = vmatprep.subr.mxu0 0.0
    %68 = vmatpush1.msra.mxu0 0.0
    %69 = vmatprep.subr.mxu0 0.0
    %70 = vmatpush1.msra.mxu0 0.0
    %71 = vmatprep.subr.mxu0 0.0
    %72 = vmatpush1.msra.mxu0 0.0
    %73 = vmatprep.subr.mxu0 0.0
    %74 = vmatpush1.msra.mxu0 0.0
    %75 = vmatprep.subr.mxu0 0.0
    %76 = vmatpush1.msra.mxu0 0.0
    %77 = vmatprep.subr.mxu0 0.0
    %78 = vmatpush1.msra.mxu0 0.0
    %79 = vmatprep.subr.mxu0 0.0
    %80 = vmatpush1.msra.mxu0 0.0
    %81 = vmatprep.subr.mxu0 0.0
    %82 = vmatpush1.msra.mxu0 0.0
    %83 = vmatprep.subr.mxu0 0.0
    %84 = vmatpush1.msra.mxu0 0.0
    %85 = vmatprep.subr.mxu0 0.0
    %86 = vmatpush1.msra.mxu0 0.0
    %87 = vmatprep.subr.mxu0 0.0
    %88 = vmatpush1.msra.mxu0 0.0
    %89 = vmatprep.subr.mxu0 0.0
    %90 = vmatpush1.msra.mxu0 0.0
    %91 = vmatprep.subr.mxu0 0.0
    %92 = vmatpush1.msra.mxu0 0.0
    %93 = vmatprep.subr.mxu0 0.0
    %94 = vmatpush1.msra.mxu0 0.0
    %95 = vmatprep.subr.mxu0 0.0
    %96 = vmatpush1.msra.mxu0 0.0
    %97 = vmatprep.subr.mxu0 0.0
    %98 = vmatpush1.msra.mxu0 0.0
    %99 = vmatprep.subr.mxu0 0.0
    %100 = vmatpush1.msra.mxu0 0.0
    %101 = vmatprep.subr.mxu0 0.0
    %102 = vmatpush1.msra.mxu0 0.0
    %103 = vmatprep.subr.mxu0 0.0
    %104 = vmatpush1.msra.mxu0 0.0
    %105 = vmatprep.subr.mxu0 0.0
    %106 = vmatpush1.msra.mxu0 0.0
    %107 = vmatprep.mubr.f32.mxu0 0.0
    %108 = vmatmul.mubr.f32.gmra.mrb[0].mxu0 %v38
    %v109 = vpop.f32.mrb[0].mxu0
    %v110 = vadd.f32 %v34, %v109
    %v111 = vpop.f32.mrb[0].mxu0
    %112 = vmatprep.mubr.f32.mxu0 0.0
    %113 = vmatmul.mubr.f32.gmra.mrb[0].mxu0 %v41
    %v114 = vpop.f32.mrb[0].mxu0
    %v115 = vadd.f32 %v34, %v114
    %v116 = vpop.f32.mrb[0].mxu0
    %117 = vdwg.mxu0
    %v118 = vxor.u32 %v110, 2147483648
    %v119 = vxor.u32 %v115, 2147483648
    %v120 = vmul.f32 %v118, 1.442695
    %v121 = vpow.pop %v120
    %v122 = vmul.f32 %v119, 1.442695
    %v123 = vpow.pop %v122
    %v124 = vadd.f32 %v121, 1.0
    %v125 = vadd.f32 %v123, 1.0
    %v126 = vrcp.pop %v124
    %v127 = vmul.f32 1.0, %v126
    %v128 = vrcp.pop %v125
    %v129 = vmul.f32 1.0, %v128
    %v130 = vmul.f32 %v110, %v127
    %v131 = vmul.f32 %v115, %v129
    %v132 = vld [vmem:[%s3] sm:$0xff]
    %v133 = vld [vmem:[%s3 + $0x8] sm:$0xff]
    %v134 = vld [vmem:[%s3 + $0x10] sm:$0xff]
    %v135 = vld [vmem:[%s3 + $0x18] sm:$0xff]
    %v136 = vld [vmem:[%s4] sm:$0x1]
    %v138 = vlaneseq
    %v139 = vshrl.u32 %v138, 7
    %v140 = vsub.s32 0, %v139
    %v141 = vrot.slane %v136, %v140
    %v144 = vsel %vm36, %v130, 0
    %v147 = vsel %vm36, %v131, 0
    %149 = vmatprep.subr.mxu0 0.0
    %150 = vmatpush1.msra.mxu0 %v132
    %151 = vmatprep.subr.mxu0 0.0
    %152 = vmatpush1.msra.mxu0 %v133
    %153 = vmatprep.subr.mxu0 0.0
    %154 = vmatpush1.msra.mxu0 %v134
    %155 = vmatprep.subr.mxu0 0.0
    %156 = vmatpush1.msra.mxu0 %v135
    %157 = vmatprep.subr.mxu0 0.0
    %158 = vmatpush1.msra.mxu0 0.0
    %159 = vmatprep.subr.mxu0 0.0
    %160 = vmatpush1.msra.mxu0 0.0
    %161 = vmatprep.subr.mxu0 0.0
    %162 = vmatpush1.msra.mxu0 0.0
    %163 = vmatprep.subr.mxu0 0.0
    %164 = vmatpush1.msra.mxu0 0.0
    %165 = vmatprep.subr.mxu0 0.0
    %166 = vmatpush1.msra.mxu0 0.0
    %167 = vmatprep.subr.mxu0 0.0
    %168 = vmatpush1.msra.mxu0 0.0
    %169 = vmatprep.subr.mxu0 0.0
    %170 = vmatpush1.msra.mxu0 0.0
    %171 = vmatprep.subr.mxu0 0.0
    %172 = vmatpush1.msra.mxu0 0.0
    %173 = vmatprep.subr.mxu0 0.0
    %174 = vmatpush1.msra.mxu0 0.0
    %175 = vmatprep.subr.mxu0 0.0
    %176 = vmatpush1.msra.mxu0 0.0
    %177 = vmatprep.subr.mxu0 0.0
    %178 = vmatpush1.msra.mxu0 0.0
    %179 = vmatprep.subr.mxu0 0.0
    %180 = vmatpush1.msra.mxu0 0.0
    %181 = vmatprep.subr.mxu0 0.0
    %182 = vmatpush1.msra.mxu0 0.0
    %183 = vmatprep.subr.mxu0 0.0
    %184 = vmatpush1.msra.mxu0 0.0
    %185 = vmatprep.subr.mxu0 0.0
    %186 = vmatpush1.msra.mxu0 0.0
    %187 = vmatprep.subr.mxu0 0.0
    %188 = vmatpush1.msra.mxu0 0.0
    %189 = vmatprep.subr.mxu0 0.0
    %190 = vmatpush1.msra.mxu0 0.0
    %191 = vmatprep.subr.mxu0 0.0
    %192 = vmatpush1.msra.mxu0 0.0
    %193 = vmatprep.subr.mxu0 0.0
    %194 = vmatpush1.msra.mxu0 0.0
    %195 = vmatprep.subr.mxu0 0.0
    %196 = vmatpush1.msra.mxu0 0.0
    %197 = vmatprep.subr.mxu0 0.0
    %198 = vmatpush1.msra.mxu0 0.0
    %199 = vmatprep.subr.mxu0 0.0
    %200 = vmatpush1.msra.mxu0 0.0
    %201 = vmatprep.subr.mxu0 0.0
    %202 = vmatpush1.msra.mxu0 0.0
    %203 = vmatprep.subr.mxu0 0.0
    %204 = vmatpush1.msra.mxu0 0.0
    %205 = vmatprep.subr.mxu0 0.0
    %206 = vmatpush1.msra.mxu0 0.0
    %207 = vmatprep.subr.mxu0 0.0
    %208 = vmatpush1.msra.mxu0 0.0
    %209 = vmatprep.subr.mxu0 0.0
    %210 = vmatpush1.msra.mxu0 0.0
    %211 = vmatprep.subr.mxu0 0.0
    %212 = vmatpush1.msra.mxu0 0.0
    %213 = vmatprep.mubr.f32.mxu0 0.0
    %214 = vmatmul.mubr.f32.gmra.mrb[0].mxu0 %v144
    %v215 = vpop.f32.mrb[0].mxu0
    %v216 = vadd.f32 %v141, %v215
    %v217 = vpop.f32.mrb[0].mxu0
    %218 = vmatprep.mubr.f32.mxu0 0.0
    %219 = vmatmul.mubr.f32.gmra.mrb[0].mxu0 %v147
    %v220 = vpop.f32.mrb[0].mxu0
    %v221 = vadd.f32 %v141, %v220
    %v222 = vpop.f32.mrb[0].mxu0
    %223 = vdwg.mxu0
    %224 = vst.msk [vmem:[#allocation2] sm:$0xff] %vm36, %v216
    %225 = vst.msk [vmem:[#allocation2 + $0x8] sm:$0xff] %vm36, %v221
    // Predicated region
    $region22: #{processor_forward.19} parent=1 // pred_check
      _
    $region23: #{processor_forward.19} parent=1 // pred_check_branch
      %227 = sbr.rel (0) target = $region25
    $region24: #{processor_forward.19} parent=1 // pred_region
      %s229 = ssub.s32 256, 256
      %230 = vsyncadd [#allocation3], %s229
      %s231 = sshll.u32 [#allocation2], 4
      %s232 = int_to_ptr.vmem [resolvable:$true] %s231
      %237 = dma.vmem_to_hbm [thread:$0]  %s232, 256, %s5, [#allocation3], 128, 128, 8
    $region25: #{processor_forward.19} parent=1 // pred_fallthru
      _
    // Predicated region
    $region26: #{processor_forward.19} parent=1 // pred_check
      _
    $region27: #{processor_forward.19} parent=1 // pred_check_branch
      %239 = sbr.rel (0) target = $region29
    $region28: #{processor_forward.19} parent=1 // pred_region
      %240 = dma.done [#allocation3], 256
    $region29: #{processor_forward.19} parent=1 // pred_fallthru
      _
    %241 = vsyncpa [#allocation3], 1

</llo_original>
